<compile_context>
chip_gen: v6e
topology: v6e:2x2x1
jax: 0.10.0
libtpu: 0.0.40
codegen_flags: <defaults>
</compile_context>

<pallas_src>
import jax
import jax.numpy as jnp
from jax.experimental import pallas as pl
from jax.experimental.pallas import tpu as pltpu

EPS = 1e-5          # nn.BatchNorm1d default eps
NEG_SLOPE = 0.01    # nn.LeakyReLU default negative_slope
LANE = 128


def _leaky_relu(x):
    return jnp.maximum(x, NEG_SLOPE * x)


def _round_up(n, m):
    return ((n + m - 1) // m) * m


def _pick_tb(batch):
    """Batch rows per grid step.

    Small batch -> one tile covering the whole (8-row padded) batch.
    Large batch -> 128-512 row tiles, with >=2 grid steps so the v7x megacore
    'parallel' axis shards across both TensorCores.
    """
    b8 = _round_up(batch, 8)
    if b8 <= LANE:
        return b8
    half = _round_up(-(-b8 // 2), LANE)
    return min(512, half)


def hybrid_resnet_kernel(x_ref,
                         wf_ref, bf_ref,                       # fused feature layers (block-diag)
                         w1a_ref, b1a_ref, w1b_ref, b1b_ref,   # ResidualBlock 1 (BN folded)
                         w2a_ref, b2a_ref, w2b_ref, b2b_ref,   # ResidualBlock 2 (BN folded)
                         wfc_ref, bfc_ref,                     # Linear(C, H)
                         wout_ref, bout_ref,                   # head Linear(H, 1)
                         out_ref):
    f32 = jnp.float32
    bf16 = jnp.bfloat16

    def mm(a, w_ref):
        # bf16 x bf16 MXU matmul with f32 accumulation.
        return jnp.dot(a.astype(bf16), w_ref[...], preferred_element_type=f32)

    x = x_ref[...]                                              # (TB, D_PAD) f32

    # feature_layers + torch.cat: one block-diagonal matmul, then ReLU.
    h = jnp.maximum(mm(x, wf_ref) + bf_ref[...], 0.0)           # (TB, C)

    # ResidualBlock 1: x + Lin2'(ReLU(Lin1'(x)))  (BN folded, Dropout identity)
    t = jnp.maximum(mm(h, w1a_ref) + b1a_ref[...], 0.0)         # (TB, H)
    h = _leaky_relu(h + mm(t, w1b_ref) + b1b_ref[...])          # (TB, C)

    # ResidualBlock 2
    t = jnp.maximum(mm(h, w2a_ref) + b2a_ref[...], 0.0)
    h = _leaky_relu(h + mm(t, w2b_ref) + b2b_ref[...])

    # Linear(C, H) -> LeakyReLU -> Dropout(identity)
    t = _leaky_relu(mm(h, wfc_ref) + bfc_ref[...])              # (TB, H)

    # Head Linear(H, 1): VPU mul + XLU lane reduce; 4 bytes/row writeback.
    out_ref[...] = (jnp.sum(t * wout_ref[...], axis=-1, keepdims=True)
                    + bout_ref[...])                            # (TB, 1)


# ----------------------------- wrapper / packing -----------------------------

def _fold_bn(w, b, bn):
    """Fold eval-mode BatchNorm1d into the preceding Linear (f32)."""
    s = bn["gamma"] / jnp.sqrt(bn["var"] + EPS)
    return w * s[None, :], b * s + (bn["beta"] - bn["mean"] * s)


def _pack_params(raw, feature_order, hidden_dim):
    bf16 = jnp.bfloat16
    dims = [raw["feat"][n]["w"].shape[0] for n in feature_order]
    d_total = sum(dims)
    d_pad = _round_up(d_total, LANE)
    C = len(feature_order) * hidden_dim

    # Block-diagonal feature weight: one matmul == all per-stream Linears + cat.
    # Input feature dim zero-padded to a lane-dense 128 multiple.
    wf = jnp.zeros((d_pad, C), jnp.float32)
    bf = jnp.zeros((C,), jnp.float32)
    r = 0
    for i, n in enumerate(feature_order):
        d = dims[i]
        wf = wf.at[r:r + d, i * hidden_dim:(i + 1) * hidden_dim].set(
            raw["feat"][n]["w"])
        bf = bf.at[i * hidden_dim:(i + 1) * hidden_dim].set(raw["feat"][n]["b"])
        r += d

    def fold_block(p):
        w1, b1 = _fold_bn(p["w1"], p["b1"], p["bn1"])
        w2, b2 = _fold_bn(p["w2"], p["b2"], p["bn2"])
        return w1, b1, w2, b2

    w1a, b1a, w1b, b1b = fold_block(raw["rb1"])
    w2a, b2a, w2b, b2b = fold_block(raw["rb2"])

    row = lambda v: v.reshape(1, -1)
    # Head weight kept as an f32 lane row (1, H); bias as (1, 1) scalar.
    wout = row(raw["w_out"][:, 0])
    bout = raw["b_out"].reshape(1, 1)

    params = (wf.astype(bf16), row(bf),
              w1a.astype(bf16), row(b1a), w1b.astype(bf16), row(b1b),
              w2a.astype(bf16), row(b2a), w2b.astype(bf16), row(b2b),
              raw["w_fc"].astype(bf16), row(raw["b_fc"]),
              wout, bout)
    return params, d_pad


def hybrid_resnet_forward(feature_dict, raw, feature_order, hidden_dim, output_dim):
    # TODO(synk): the fused lane-reduce head assumes the module default output_dim=1.
    assert output_dim == 1, "kernel implements the module default output_dim=1"

    x = jnp.concatenate([feature_dict[n] for n in feature_order], axis=1)
    B, d_total = x.shape

    params, d_pad = _pack_params(raw, feature_order, hidden_dim)

    tb = _pick_tb(B)
    b_pad = _round_up(B, tb)
    x = jnp.pad(x, ((0, b_pad - B), (0, d_pad - d_total)))

    def full_spec(shape):
        return pl.BlockSpec(shape, lambda i: (0,) * len(shape))

    in_specs = [pl.BlockSpec((tb, d_pad), lambda i: (i, 0))]
    in_specs += [full_spec(p.shape) for p in params]

    out = pl.pallas_call(
        hybrid_resnet_kernel,
        out_shape=jax.ShapeDtypeStruct((b_pad, 1), jnp.float32),
        grid=(b_pad // tb,),
        in_specs=in_specs,
        out_specs=pl.BlockSpec((tb, 1), lambda i: (i, 0)),
        compiler_params=pltpu.CompilerParams(
            dimension_semantics=("parallel",),
            # >= default scoped limit on v5e (16 MiB) / v6e / v7x, well below
            # physical VMEM everywhere; real usage at TB=512 is only a few MiB.
            vmem_limit_bytes=32 * 1024 * 1024,
        ),
    )(x, *params)
    return out[:B, :output_dim]


# ------------------------------ pure-JAX reference ---------------------------

def reference_forward(feature_dict, raw, feature_order):
    """Mirrors the PyTorch forward in eval mode (unfolded BN, explicit cat), f32."""
    embs = []
    for n in feature_order:
        p = raw["feat"][n]
        embs.append(jnp.maximum(feature_dict[n] @ p["w"] + p["b"], 0.0))
    h = jnp.concatenate(embs, axis=1)

    def bn_eval(z, bn):
        return (z - bn["mean"]) / jnp.sqrt(bn["var"] + EPS) * bn["gamma"] + bn["beta"]

    def res_block(xin, p):
        t = bn_eval(xin @ p["w1"] + p["b1"], p["bn1"])
        t = jnp.maximum(t, 0.0)                       # ReLU; Dropout identity (eval)
        t = bn_eval(t @ p["w2"] + p["b2"], p["bn2"])
        return xin + t

    h = _leaky_relu(res_block(h, raw["rb1"]))
    h = _leaky_relu(res_block(h, raw["rb2"]))
    h = _leaky_relu(h @ raw["w_fc"] + raw["b_fc"])
    return h @ raw["w_out"] + raw["b_out"]


# ------------------------------------ main ------------------------------------

if __name__ == "__main__":
    B = 200                   # exercises the multi-tile (2-step) grid path
    H = 128                   # hidden_dim (module default, lane-dense)
    OUT = 1                   # output_dim (module default)
    feature_dims = {"numeric": 16, "categorical": 16}
    feature_order = list(feature_dims)
    C = len(feature_dims) * H

    key = jax.random.PRNGKey(0)
    keys = jax.random.split(key, 32)
    kit = iter(keys)

    def nrm(shape, scale=0.05):
        return scale * jax.random.normal(next(kit), shape, jnp.float32)

    def make_bn(dim):
        kg, kb, km, kv = jax.random.split(next(kit), 4)
        return {
            "gamma": 1.0 + 0.1 * jax.random.normal(kg, (dim,), jnp.float32),
            "beta": 0.1 * jax.random.normal(kb, (dim,), jnp.float32),
            "mean": 0.1 * jax.random.normal(km, (dim,), jnp.float32),
            "var": jax.random.uniform(kv, (dim,), jnp.float32, minval=0.5, maxval=1.5),
        }

    feature_dict = {
        n: jax.random.normal(next(kit), (B, d), jnp.float32)
        for n, d in feature_dims.items()
    }

    def make_rb(in_dim, hid):
        return {
            "w1": nrm((in_dim, hid)), "b1": nrm((hid,)), "bn1": make_bn(hid),
            "w2": nrm((hid, in_dim)), "b2": nrm((in_dim,)), "bn2": make_bn(in_dim),
        }

    # Weights stored as (in, out); equivalent to PyTorch's (out, in) transposed.
    raw = {
        "feat": {n: {"w": nrm((d, H)), "b": nrm((H,))}
                 for n, d in feature_dims.items()},
        "rb1": make_rb(C, H),
        "rb2": make_rb(C, H),
        "w_fc": nrm((C, H)), "b_fc": nrm((H,)),
        "w_out": nrm((H, OUT)), "b_out": nrm((OUT,)),
    }

    out = hybrid_resnet_forward(feature_dict, raw, feature_order, H, OUT)
    out = jax.block_until_ready(out)

    ref = reference_forward(feature_dict, raw, feature_order)
    assert out.shape == (B, OUT), out.shape
    # bf16 weights / bf16 MXU inputs with f32 accumulation vs a pure-f32
    # reference: loosened tolerance per review.
    assert jnp.allclose(out, ref, atol=2e-2, rtol=2e-2), (
        float(jnp.max(jnp.abs(out - ref))))

    print("KERNEL_OK")
</pallas_src>

<mosaic_0001>
module attributes {stable_mosaic.version = 11 : i64} {
  func.func @hybrid_resnet_kernel(%arg0: i32, %arg1: memref<128x128xf32, #tpu.memory_space<vmem>>, %arg2: memref<128x256xbf16, #tpu.memory_space<vmem>>, %arg3: memref<1x256xf32, #tpu.memory_space<vmem>>, %arg4: memref<256x128xbf16, #tpu.memory_space<vmem>>, %arg5: memref<1x128xf32, #tpu.memory_space<vmem>>, %arg6: memref<128x256xbf16, #tpu.memory_space<vmem>>, %arg7: memref<1x256xf32, #tpu.memory_space<vmem>>, %arg8: memref<256x128xbf16, #tpu.memory_space<vmem>>, %arg9: memref<1x128xf32, #tpu.memory_space<vmem>>, %arg10: memref<128x256xbf16, #tpu.memory_space<vmem>>, %arg11: memref<1x256xf32, #tpu.memory_space<vmem>>, %arg12: memref<256x128xbf16, #tpu.memory_space<vmem>>, %arg13: memref<1x128xf32, #tpu.memory_space<vmem>>, %arg14: memref<1x128xf32, #tpu.memory_space<vmem>>, %arg15: memref<1x1xf32, #tpu.memory_space<vmem>>, %arg16: memref<128x1xf32, #tpu.memory_space<vmem>>) attributes {dimension_semantics = [#tpu.dimension_semantics<parallel>], iteration_bounds = array<i64: 2>, scalar_prefetch = 0 : i64, scratch_operands = 0 : i64, tpu.core_type = #tpu.core_type<tc>, window_params = [{transform_indices = @transform_0, window_bounds = array<i64: 128, 128>}, {pipeline_mode = #tpu.pipeline_mode<synchronous>, transform_indices = @transform_1, window_bounds = array<i64: 128, 256>}, {pipeline_mode = #tpu.pipeline_mode<synchronous>, transform_indices = @transform_2, window_bounds = array<i64: 1, 256>}, {pipeline_mode = #tpu.pipeline_mode<synchronous>, transform_indices = @transform_3, window_bounds = array<i64: 256, 128>}, {pipeline_mode = #tpu.pipeline_mode<synchronous>, transform_indices = @transform_4, window_bounds = array<i64: 1, 128>}, {pipeline_mode = #tpu.pipeline_mode<synchronous>, transform_indices = @transform_5, window_bounds = array<i64: 128, 256>}, {pipeline_mode = #tpu.pipeline_mode<synchronous>, transform_indices = @transform_6, window_bounds = array<i64: 1, 256>}, {pipeline_mode = #tpu.pipeline_mode<synchronous>, transform_indices = @transform_7, window_bounds = array<i64: 256, 128>}, {pipeline_mode = #tpu.pipeline_mode<synchronous>, transform_indices = @transform_8, window_bounds = array<i64: 1, 128>}, {pipeline_mode = #tpu.pipeline_mode<synchronous>, transform_indices = @transform_9, window_bounds = array<i64: 128, 256>}, {pipeline_mode = #tpu.pipeline_mode<synchronous>, transform_indices = @transform_10, window_bounds = array<i64: 1, 256>}, {pipeline_mode = #tpu.pipeline_mode<synchronous>, transform_indices = @transform_11, window_bounds = array<i64: 256, 128>}, {pipeline_mode = #tpu.pipeline_mode<synchronous>, transform_indices = @transform_12, window_bounds = array<i64: 1, 128>}, {pipeline_mode = #tpu.pipeline_mode<synchronous>, transform_indices = @transform_13, window_bounds = array<i64: 1, 128>}, {pipeline_mode = #tpu.pipeline_mode<synchronous>, transform_indices = @transform_14, window_bounds = array<i64: 1, 1>}, {transform_indices = @transform_15, window_bounds = array<i64: 128, 1>}]} {
    %c0 = arith.constant 0 : index
    %c0_0 = arith.constant 0 : index
    %0 = vector.load %arg1[%c0, %c0_0] : memref<128x128xf32, #tpu.memory_space<vmem>>, vector<128x128xf32>
    %1 = arith.truncf %0 : vector<128x128xf32> to vector<128x128xbf16>
    %c0_1 = arith.constant 0 : index
    %c0_2 = arith.constant 0 : index
    %2 = vector.load %arg2[%c0_1, %c0_2] : memref<128x256xbf16, #tpu.memory_space<vmem>>, vector<128x256xbf16>
    %cst = arith.constant dense<0.000000e+00> : vector<128x256xf32>
    %3 = tpu.matmul %1, %2, %cst {dimension_numbers = #tpu.dot_dimension_numbers<[1], [0], [0], [1], [0, 0, 1, 1], [], []>} : vector<128x128xbf16>, vector<128x256xbf16>, vector<128x256xf32> -> vector<128x256xf32>
    %c0_3 = arith.constant 0 : index
    %c0_4 = arith.constant 0 : index
    %4 = vector.load %arg3[%c0_3, %c0_4] : memref<1x256xf32, #tpu.memory_space<vmem>>, vector<1x256xf32>
    %5 = vector.broadcast %4 : vector<1x256xf32> to vector<128x256xf32>
    %6 = arith.addf %3, %5 : vector<128x256xf32>
    %cst_5 = arith.constant 0.000000e+00 : f32
    %7 = vector.broadcast %cst_5 : f32 to vector<128x256xf32>
    %8 = arith.maximumf %6, %7 : vector<128x256xf32>
    %9 = arith.truncf %8 : vector<128x256xf32> to vector<128x256xbf16>
    %c0_6 = arith.constant 0 : index
    %c0_7 = arith.constant 0 : index
    %10 = vector.load %arg4[%c0_6, %c0_7] : memref<256x128xbf16, #tpu.memory_space<vmem>>, vector<256x128xbf16>
    %cst_8 = arith.constant dense<0.000000e+00> : vector<128x128xf32>
    %11 = tpu.matmul %9, %10, %cst_8 {dimension_numbers = #tpu.dot_dimension_numbers<[1], [0], [0], [1], [0, 0, 1, 1], [], []>} : vector<128x256xbf16>, vector<256x128xbf16>, vector<128x128xf32> -> vector<128x128xf32>
    %c0_9 = arith.constant 0 : index
    %c0_10 = arith.constant 0 : index
    %12 = vector.load %arg5[%c0_9, %c0_10] : memref<1x128xf32, #tpu.memory_space<vmem>>, vector<1x128xf32>
    %13 = vector.broadcast %12 : vector<1x128xf32> to vector<128x128xf32>
    %14 = arith.addf %11, %13 : vector<128x128xf32>
    %cst_11 = arith.constant 0.000000e+00 : f32
    %15 = vector.broadcast %cst_11 : f32 to vector<128x128xf32>
    %16 = arith.maximumf %14, %15 : vector<128x128xf32>
    %17 = arith.truncf %16 : vector<128x128xf32> to vector<128x128xbf16>
    %c0_12 = arith.constant 0 : index
    %c0_13 = arith.constant 0 : index
    %18 = vector.load %arg6[%c0_12, %c0_13] : memref<128x256xbf16, #tpu.memory_space<vmem>>, vector<128x256xbf16>
    %cst_14 = arith.constant dense<0.000000e+00> : vector<128x256xf32>
    %19 = tpu.matmul %17, %18, %cst_14 {dimension_numbers = #tpu.dot_dimension_numbers<[1], [0], [0], [1], [0, 0, 1, 1], [], []>} : vector<128x128xbf16>, vector<128x256xbf16>, vector<128x256xf32> -> vector<128x256xf32>
    %20 = arith.addf %8, %19 : vector<128x256xf32>
    %c0_15 = arith.constant 0 : index
    %c0_16 = arith.constant 0 : index
    %21 = vector.load %arg7[%c0_15, %c0_16] : memref<1x256xf32, #tpu.memory_space<vmem>>, vector<1x256xf32>
    %22 = vector.broadcast %21 : vector<1x256xf32> to vector<128x256xf32>
    %23 = arith.addf %20, %22 : vector<128x256xf32>
    %cst_17 = arith.constant 0.00999999977 : f32
    %24 = vector.broadcast %cst_17 : f32 to vector<128x256xf32>
    %25 = arith.mulf %24, %23 : vector<128x256xf32>
    %26 = arith.maximumf %23, %25 : vector<128x256xf32>
    %27 = arith.truncf %26 : vector<128x256xf32> to vector<128x256xbf16>
    %c0_18 = arith.constant 0 : index
    %c0_19 = arith.constant 0 : index
    %28 = vector.load %arg8[%c0_18, %c0_19] : memref<256x128xbf16, #tpu.memory_space<vmem>>, vector<256x128xbf16>
    %cst_20 = arith.constant dense<0.000000e+00> : vector<128x128xf32>
    %29 = tpu.matmul %27, %28, %cst_20 {dimension_numbers = #tpu.dot_dimension_numbers<[1], [0], [0], [1], [0, 0, 1, 1], [], []>} : vector<128x256xbf16>, vector<256x128xbf16>, vector<128x128xf32> -> vector<128x128xf32>
    %c0_21 = arith.constant 0 : index
    %c0_22 = arith.constant 0 : index
    %30 = vector.load %arg9[%c0_21, %c0_22] : memref<1x128xf32, #tpu.memory_space<vmem>>, vector<1x128xf32>
    %31 = vector.broadcast %30 : vector<1x128xf32> to vector<128x128xf32>
    %32 = arith.addf %29, %31 : vector<128x128xf32>
    %cst_23 = arith.constant 0.000000e+00 : f32
    %33 = vector.broadcast %cst_23 : f32 to vector<128x128xf32>
    %34 = arith.maximumf %32, %33 : vector<128x128xf32>
    %35 = arith.truncf %34 : vector<128x128xf32> to vector<128x128xbf16>
    %c0_24 = arith.constant 0 : index
    %c0_25 = arith.constant 0 : index
    %36 = vector.load %arg10[%c0_24, %c0_25] : memref<128x256xbf16, #tpu.memory_space<vmem>>, vector<128x256xbf16>
    %cst_26 = arith.constant dense<0.000000e+00> : vector<128x256xf32>
    %37 = tpu.matmul %35, %36, %cst_26 {dimension_numbers = #tpu.dot_dimension_numbers<[1], [0], [0], [1], [0, 0, 1, 1], [], []>} : vector<128x128xbf16>, vector<128x256xbf16>, vector<128x256xf32> -> vector<128x256xf32>
    %38 = arith.addf %26, %37 : vector<128x256xf32>
    %c0_27 = arith.constant 0 : index
    %c0_28 = arith.constant 0 : index
    %39 = vector.load %arg11[%c0_27, %c0_28] : memref<1x256xf32, #tpu.memory_space<vmem>>, vector<1x256xf32>
    %40 = vector.broadcast %39 : vector<1x256xf32> to vector<128x256xf32>
    %41 = arith.addf %38, %40 : vector<128x256xf32>
    %cst_29 = arith.constant 0.00999999977 : f32
    %42 = vector.broadcast %cst_29 : f32 to vector<128x256xf32>
    %43 = arith.mulf %42, %41 : vector<128x256xf32>
    %44 = arith.maximumf %41, %43 : vector<128x256xf32>
    %45 = arith.truncf %44 : vector<128x256xf32> to vector<128x256xbf16>
    %c0_30 = arith.constant 0 : index
    %c0_31 = arith.constant 0 : index
    %46 = vector.load %arg12[%c0_30, %c0_31] : memref<256x128xbf16, #tpu.memory_space<vmem>>, vector<256x128xbf16>
    %cst_32 = arith.constant dense<0.000000e+00> : vector<128x128xf32>
    %47 = tpu.matmul %45, %46, %cst_32 {dimension_numbers = #tpu.dot_dimension_numbers<[1], [0], [0], [1], [0, 0, 1, 1], [], []>} : vector<128x256xbf16>, vector<256x128xbf16>, vector<128x128xf32> -> vector<128x128xf32>
    %c0_33 = arith.constant 0 : index
    %c0_34 = arith.constant 0 : index
    %48 = vector.load %arg13[%c0_33, %c0_34] : memref<1x128xf32, #tpu.memory_space<vmem>>, vector<1x128xf32>
    %49 = vector.broadcast %48 : vector<1x128xf32> to vector<128x128xf32>
    %50 = arith.addf %47, %49 : vector<128x128xf32>
    %cst_35 = arith.constant 0.00999999977 : f32
    %51 = vector.broadcast %cst_35 : f32 to vector<128x128xf32>
    %52 = arith.mulf %51, %50 : vector<128x128xf32>
    %53 = arith.maximumf %50, %52 : vector<128x128xf32>
    %c0_36 = arith.constant 0 : index
    %c0_37 = arith.constant 0 : index
    %54 = vector.load %arg14[%c0_36, %c0_37] : memref<1x128xf32, #tpu.memory_space<vmem>>, vector<1x128xf32>
    %55 = vector.broadcast %54 : vector<1x128xf32> to vector<128x128xf32>
    %56 = arith.mulf %53, %55 : vector<128x128xf32>
    %cst_38 = arith.constant dense<0.000000e+00> : vector<128xf32>
    %57 = vector.multi_reduction <add>, %56, %cst_38 [1] : vector<128x128xf32> to vector<128xf32>
    %58 = vector.shape_cast %57 : vector<128xf32> to vector<128x1xf32>
    %c0_39 = arith.constant 0 : index
    %c0_40 = arith.constant 0 : index
    %59 = vector.load %arg15[%c0_39, %c0_40] : memref<1x1xf32, #tpu.memory_space<vmem>>, vector<1x1xf32>
    %60 = vector.broadcast %59 : vector<1x1xf32> to vector<128x1xf32>
    %61 = arith.addf %58, %60 : vector<128x1xf32>
    %c0_41 = arith.constant 0 : index
    %c0_42 = arith.constant 0 : index
    %62 = vector.load %arg16[%c0_41, %c0_42] : memref<128x1xf32, #tpu.memory_space<vmem>>, vector<128x1xf32>
    tpu.vector_store %arg16[%c0_41, %c0_42], %61 {strides = array<i32>} : memref<128x1xf32, #tpu.memory_space<vmem>>, vector<128x1xf32>,
    return
  }
  func.func @transform_0(%arg0: i32) -> (i32, i32) {
    %c0_i32 = arith.constant 0 : i32
    %c0_i32_0 = arith.constant 0 : i32
    return %arg0, %c0_i32 : i32, i32
  }
  func.func @transform_1(%arg0: i32) -> (i32, i32) {
    %c0_i32 = arith.constant 0 : i32
    %c0_i32_0 = arith.constant 0 : i32
    %c0_i32_1 = arith.constant 0 : i32
    return %c0_i32, %c0_i32_0 : i32, i32
  }
  func.func @transform_2(%arg0: i32) -> (i32, i32) {
    %c0_i32 = arith.constant 0 : i32
    %c0_i32_0 = arith.constant 0 : i32
    %c0_i32_1 = arith.constant 0 : i32
    return %c0_i32, %c0_i32_0 : i32, i32
  }
  func.func @transform_3(%arg0: i32) -> (i32, i32) {
    %c0_i32 = arith.constant 0 : i32
    %c0_i32_0 = arith.constant 0 : i32
    %c0_i32_1 = arith.constant 0 : i32
    return %c0_i32, %c0_i32_0 : i32, i32
  }
  func.func @transform_4(%arg0: i32) -> (i32, i32) {
    %c0_i32 = arith.constant 0 : i32
    %c0_i32_0 = arith.constant 0 : i32
    %c0_i32_1 = arith.constant 0 : i32
    return %c0_i32, %c0_i32_0 : i32, i32
  }
  func.func @transform_5(%arg0: i32) -> (i32, i32) {
    %c0_i32 = arith.constant 0 : i32
    %c0_i32_0 = arith.constant 0 : i32
    %c0_i32_1 = arith.constant 0 : i32
    return %c0_i32, %c0_i32_0 : i32, i32
  }
  func.func @transform_6(%arg0: i32) -> (i32, i32) {
    %c0_i32 = arith.constant 0 : i32
    %c0_i32_0 = arith.constant 0 : i32
    %c0_i32_1 = arith.constant 0 : i32
    return %c0_i32, %c0_i32_0 : i32, i32
  }
  func.func @transform_7(%arg0: i32) -> (i32, i32) {
    %c0_i32 = arith.constant 0 : i32
    %c0_i32_0 = arith.constant 0 : i32
    %c0_i32_1 = arith.constant 0 : i32
    return %c0_i32, %c0_i32_0 : i32, i32
  }
  func.func @transform_8(%arg0: i32) -> (i32, i32) {
    %c0_i32 = arith.constant 0 : i32
    %c0_i32_0 = arith.constant 0 : i32
    %c0_i32_1 = arith.constant 0 : i32
    return %c0_i32, %c0_i32_0 : i32, i32
  }
  func.func @transform_9(%arg0: i32) -> (i32, i32) {
    %c0_i32 = arith.constant 0 : i32
    %c0_i32_0 = arith.constant 0 : i32
    %c0_i32_1 = arith.constant 0 : i32
    return %c0_i32, %c0_i32_0 : i32, i32
  }
  func.func @transform_10(%arg0: i32) -> (i32, i32) {
    %c0_i32 = arith.constant 0 : i32
    %c0_i32_0 = arith.constant 0 : i32
    %c0_i32_1 = arith.constant 0 : i32
    return %c0_i32, %c0_i32_0 : i32, i32
  }
  func.func @transform_11(%arg0: i32) -> (i32, i32) {
    %c0_i32 = arith.constant 0 : i32
    %c0_i32_0 = arith.constant 0 : i32
    %c0_i32_1 = arith.constant 0 : i32
    return %c0_i32, %c0_i32_0 : i32, i32
  }
  func.func @transform_12(%arg0: i32) -> (i32, i32) {
    %c0_i32 = arith.constant 0 : i32
    %c0_i32_0 = arith.constant 0 : i32
    %c0_i32_1 = arith.constant 0 : i32
    return %c0_i32, %c0_i32_0 : i32, i32
  }
  func.func @transform_13(%arg0: i32) -> (i32, i32) {
    %c0_i32 = arith.constant 0 : i32
    %c0_i32_0 = arith.constant 0 : i32
    %c0_i32_1 = arith.constant 0 : i32
    return %c0_i32, %c0_i32_0 : i32, i32
  }
  func.func @transform_14(%arg0: i32) -> (i32, i32) {
    %c0_i32 = arith.constant 0 : i32
    %c0_i32_0 = arith.constant 0 : i32
    %c0_i32_1 = arith.constant 0 : i32
    return %c0_i32, %c0_i32_0 : i32, i32
  }
  func.func @transform_15(%arg0: i32) -> (i32, i32) {
    %c0_i32 = arith.constant 0 : i32
    %c0_i32_0 = arith.constant 0 : i32
    return %arg0, %c0_i32 : i32, i32
  }
}

</mosaic_0001>

<llo_original>
// kernel: tpu_custom_call.1
$region0: #{tpu_custom_call.1}
  #allocation0 [shape = 'u32[]', space=smem, size = 0x4, offset = 0x4, fixed_abs, tag = 'smem constant byte address 0x4 - core index']
  #allocation1 [shape = 'u32[144,128]{1,0:T(1,128)}', space=vmem, size = 0x12000, scoped, tag = 'internal scratch']
  #allocation2 [shape = 'f32[1,1]{1,0:T(1,128)S(1)}', space=vmem, size = 0x200, scoped, tag = 'scoped memory for tpu_custom_call.1']
  %s0 = inlined_call_operand.hbm [shape: f32[256,128], index: 0, kind: input, shape index: {}]
  %s1 = inlined_call_operand.hbm [shape: bf16[128,256], index: 1, kind: input, shape index: {}]
  %s2 = inlined_call_operand.vmem [shape: f32[1,256], index: 2, kind: input, shape index: {}]
  %s3 = inlined_call_operand.hbm [shape: bf16[256,128], index: 3, kind: input, shape index: {}]
  %s4 = inlined_call_operand.vmem [shape: f32[1,128], index: 4, kind: input, shape index: {}]
  %s5 = inlined_call_operand.hbm [shape: bf16[128,256], index: 5, kind: input, shape index: {}]
  %s6 = inlined_call_operand.vmem [shape: f32[1,256], index: 6, kind: input, shape index: {}]
  %s7 = inlined_call_operand.hbm [shape: bf16[256,128], index: 7, kind: input, shape index: {}]
  %s8 = inlined_call_operand.vmem [shape: f32[1,128], index: 8, kind: input, shape index: {}]
  %s9 = inlined_call_operand.hbm [shape: bf16[128,256], index: 9, kind: input, shape index: {}]
  %s10 = inlined_call_operand.vmem [shape: f32[1,256], index: 10, kind: input, shape index: {}]
  %s11 = inlined_call_operand.hbm [shape: bf16[256,128], index: 11, kind: input, shape index: {}]
  %s12 = inlined_call_operand.vmem [shape: f32[1,128], index: 12, kind: input, shape index: {}]
  %s13 = inlined_call_operand.vmem [shape: f32[1,128], index: 13, kind: input, shape index: {}]
  %s14 = inlined_call_operand.<no memory space> [shape: f32[1,1], index: 14, kind: input, shape index: {}]
  %s15 = inlined_call_operand.vmem [shape: f32[256,1], index: 15, kind: output, shape index: {}]
  %s16 = sld [smem:[#allocation0]]
  $region121: #{tpu_custom_call.1} parent=0
    _
  %s18 = ssub.s32 1, %s16
  %s19 = scalar_select 0, %s18, %s16
  %v20 = vstv %s14
  %21 = vst [vmem:[#allocation2] sm:$0x1] %v20
  $region1: #{tpu_custom_call.1} parent=0
    #allocation3 [shape = 'u8[131072]{0}', space=vmem, size = 0x20000, scoped, tag = 'input window, operand 0']
    #allocation4 [shape = 's32[2]{0}', space=sflag, size = 0x8, scoped, tag = 'scoped memory for tpu_custom_call.1']
    #allocation5 [shape = 'u8[65536]{0}', space=vmem, size = 0x10000, scoped, tag = 'input window, operand 1, single buffered']
    #allocation6 [shape = 's32[1]{0}', space=sflag, size = 0x4, scoped, tag = 'scoped memory for tpu_custom_call.1']
    #allocation7 [shape = 'u8[65536]{0}', space=vmem, size = 0x10000, scoped, tag = 'input window, operand 3, single buffered']
    #allocation8 [shape = 'u8[65536]{0}', space=vmem, size = 0x10000, scoped, tag = 'input window, operand 5, single buffered']
    #allocation9 [shape = 's32[1]{0}', space=sflag, size = 0x4, scoped, tag = 'scoped memory for tpu_custom_call.1']
    #allocation10 [shape = 'u8[65536]{0}', space=vmem, size = 0x10000, scoped, tag = 'input window, operand 7, single buffered']
    #allocation11 [shape = 'u8[65536]{0}', space=vmem, size = 0x10000, scoped, tag = 'input window, operand 9, single buffered']
    #allocation12 [shape = 's32[1]{0}', space=sflag, size = 0x4, scoped, tag = 'scoped memory for tpu_custom_call.1']
    #allocation13 [shape = 'u8[65536]{0}', space=vmem, size = 0x10000, scoped, tag = 'input window, operand 11, single buffered']
    %22 = vsyncpa [#allocation4], 0
    %s23 = scalar_lea.sflag [#allocation4], 1
    %24 = vsyncpa %s23, 0
    %25 = vsyncpa [#allocation6], 0
    %26 = vsyncpa [#allocation9], 0
    %27 = vsyncpa [#allocation12], 0
    loop: start=0, step=1, limit=4
    $region2: #{tpu_custom_call.1} parent=1 // loop_pre_header
      _
    $region3: #{tpu_custom_call.1} parent=1 // loop_header
      %s29 = sphi 0, %s33
      %p30 = scmp.ge.s32.totalorder %s29, 4
      %s39 = sphi 0, %s41
      %s42 = sphi 0, %s39
      %s43 = sphi 0, %s42
      %s59 = sphi 0, %s43
      %s63 = sphi 0, %s63
      %s65 = sphi 0, %s63
      %s66 = sphi 0, %s65
      %s80 = sphi 0, %s66
      %s84 = sphi 0, %s84
      %s86 = sphi 0, %s84
      %s87 = sphi 0, %s86
      %s101 = sphi 0, %s87
      %s105 = sphi 0, %s105
      %s107 = sphi 0, %s105
      %s108 = sphi 0, %s107
      %s122 = sphi 0, %s108
      %s126 = sphi 0, %s126
      %s128 = sphi 0, %s126
      %s129 = sphi 0, %s128
      %s143 = sphi 0, %s129
      %s147 = sphi 0, %s147
      %s149 = sphi 0, %s147
      %s150 = sphi 0, %s149
      %s164 = sphi 0, %s150
      %s168 = sphi 0, %s168
      %s170 = sphi 0, %s168
      %s171 = sphi 0, %s170
      %s185 = sphi 0, %s171
      %s189 = sphi 0, %s189
      %s191 = sphi 0, %s189
      %s192 = sphi 0, %s191
      %s206 = sphi 0, %s192
      %s210 = sphi 0, %s210
      %s212 = sphi 0, %s210
      %s213 = sphi 0, %s212
      %s227 = sphi 0, %s213
      %s231 = sphi 0, %s231
      %s233 = sphi 0, %s231
      %s234 = sphi 0, %s233
      %s248 = sphi 0, %s234
      %s252 = sphi 0, %s252
      %s254 = sphi 0, %s252
      %s255 = sphi 0, %s254
      %s269 = sphi 0, %s255
      %s273 = sphi 0, %s273
      %s275 = sphi 0, %s273
      %s276 = sphi 0, %s275
      %s290 = sphi 0, %s276
      %s294 = sphi 0, %s294
      %s296 = sphi 0, %s294
      %s297 = sphi 0, %s296
      %s311 = sphi 0, %s297
      %s315 = sphi 0, %s315
      %s317 = sphi 0, %s315
      %s318 = sphi 0, %s317
      %s332 = sphi 0, %s318
      %s336 = sphi 0, %s336
      %s338 = sphi 0, %s336
      %s339 = sphi 0, %s338
      %s353 = sphi 0, %s339
      %s359 = sphi 0, %s361
      %s362 = sphi 0, %s359
      %s363 = sphi 0, %s362
      %s379 = sphi 0, %s363
    $region4: #{tpu_custom_call.1} parent=1 // loop_header_branch
      %32 = sbr.rel (%p30) target = $region8
    $region5: #{tpu_custom_call.1} parent=1 // loop_body
      %s34 = ssub.s32 %s29, 1
      %s35 = ssub.s32 %s29, 2
      %s36 = sadd.s32 %s29, 1
      %s37 = ssub.s32 %s29, %s36
      %p38 = scmp.eq.s32.totalorder %s37, 0
      %s40 = sadd.s32 %s39, 1
      %s41 = scalar_select %p38, %s39, %s40
      %p44 = pneg %p38
      %p45 = scmp.eq.s32.totalorder %s29, 1
      %p46 = por %p44, %p45
      %p47 = scmp.ne.s32.totalorder %s39, %s42
      %p48 = scmp.eq.s32.totalorder %s29, 0
      %p49 = por %p47, %p48
      %p50 = scmp.ne.s32.totalorder %s39, %s42
      %p51 = scmp.eq.s32.totalorder %s34, 1
      %p52 = por %p50, %p51
      %p53 = scmp.ne.s32.totalorder %s42, %s43
      %p54 = scmp.eq.s32.totalorder %s34, 0
      %p55 = por %p53, %p54
      %p56 = scmp.ne.s32.totalorder %s42, %s43
      %p57 = scmp.eq.s32.totalorder %s35, 1
      %p58 = por %p56, %p57
      %p60 = scmp.ne.s32.totalorder %s43, %s59
      %p61 = scmp.eq.s32.totalorder %s35, 0
      %p62 = por %p60, %p61
      %s64 = sadd.s32 %s63, 1
      %p67 = scmp.eq.s32.totalorder %s29, 1
      %p68 = scmp.ne.s32.totalorder %s63, %s65
      %p69 = scmp.eq.s32.totalorder %s29, 0
      %p70 = por %p68, %p69
      %p71 = scmp.ne.s32.totalorder %s63, %s65
      %p72 = scmp.eq.s32.totalorder %s34, 1
      %p73 = por %p71, %p72
      %p74 = scmp.ne.s32.totalorder %s65, %s66
      %p75 = scmp.eq.s32.totalorder %s34, 0
      %p76 = por %p74, %p75
      %p77 = scmp.ne.s32.totalorder %s65, %s66
      %p78 = scmp.eq.s32.totalorder %s35, 1
      %p79 = por %p77, %p78
      %p81 = scmp.ne.s32.totalorder %s66, %s80
      %p82 = scmp.eq.s32.totalorder %s35, 0
      %p83 = por %p81, %p82
      %s85 = sadd.s32 %s84, 1
      %p88 = scmp.eq.s32.totalorder %s29, 1
      %p89 = scmp.ne.s32.totalorder %s84, %s86
      %p90 = scmp.eq.s32.totalorder %s29, 0
      %p91 = por %p89, %p90
      %p92 = scmp.ne.s32.totalorder %s84, %s86
      %p93 = scmp.eq.s32.totalorder %s34, 1
      %p94 = por %p92, %p93
      %p95 = scmp.ne.s32.totalorder %s86, %s87
      %p96 = scmp.eq.s32.totalorder %s34, 0
      %p97 = por %p95, %p96
      %p98 = scmp.ne.s32.totalorder %s86, %s87
      %p99 = scmp.eq.s32.totalorder %s35, 1
      %p100 = por %p98, %p99
      %p102 = scmp.ne.s32.totalorder %s87, %s101
      %p103 = scmp.eq.s32.totalorder %s35, 0
      %p104 = por %p102, %p103
      %s106 = sadd.s32 %s105, 1
      %p109 = scmp.eq.s32.totalorder %s29, 1
      %p110 = scmp.ne.s32.totalorder %s105, %s107
      %p111 = scmp.eq.s32.totalorder %s29, 0
      %p112 = por %p110, %p111
      %p113 = scmp.ne.s32.totalorder %s105, %s107
      %p114 = scmp.eq.s32.totalorder %s34, 1
      %p115 = por %p113, %p114
      %p116 = scmp.ne.s32.totalorder %s107, %s108
      %p117 = scmp.eq.s32.totalorder %s34, 0
      %p118 = por %p116, %p117
      %p119 = scmp.ne.s32.totalorder %s107, %s108
      %p120 = scmp.eq.s32.totalorder %s35, 1
      %p121 = por %p119, %p120
      %p123 = scmp.ne.s32.totalorder %s108, %s122
      %p124 = scmp.eq.s32.totalorder %s35, 0
      %p125 = por %p123, %p124
      %s127 = sadd.s32 %s126, 1
      %p130 = scmp.eq.s32.totalorder %s29, 1
      %p131 = scmp.ne.s32.totalorder %s126, %s128
      %p132 = scmp.eq.s32.totalorder %s29, 0
      %p133 = por %p131, %p132
      %p134 = scmp.ne.s32.totalorder %s126, %s128
      %p135 = scmp.eq.s32.totalorder %s34, 1
      %p136 = por %p134, %p135
      %p137 = scmp.ne.s32.totalorder %s128, %s129
      %p138 = scmp.eq.s32.totalorder %s34, 0
      %p139 = por %p137, %p138
      %p140 = scmp.ne.s32.totalorder %s128, %s129
      %p141 = scmp.eq.s32.totalorder %s35, 1
      %p142 = por %p140, %p141
      %p144 = scmp.ne.s32.totalorder %s129, %s143
      %p145 = scmp.eq.s32.totalorder %s35, 0
      %p146 = por %p144, %p145
      %s148 = sadd.s32 %s147, 1
      %p151 = scmp.eq.s32.totalorder %s29, 1
      %p152 = scmp.ne.s32.totalorder %s147, %s149
      %p153 = scmp.eq.s32.totalorder %s29, 0
      %p154 = por %p152, %p153
      %p155 = scmp.ne.s32.totalorder %s147, %s149
      %p156 = scmp.eq.s32.totalorder %s34, 1
      %p157 = por %p155, %p156
      %p158 = scmp.ne.s32.totalorder %s149, %s150
      %p159 = scmp.eq.s32.totalorder %s34, 0
      %p160 = por %p158, %p159
      %p161 = scmp.ne.s32.totalorder %s149, %s150
      %p162 = scmp.eq.s32.totalorder %s35, 1
      %p163 = por %p161, %p162
      %p165 = scmp.ne.s32.totalorder %s150, %s164
      %p166 = scmp.eq.s32.totalorder %s35, 0
      %p167 = por %p165, %p166
      %s169 = sadd.s32 %s168, 1
      %p172 = scmp.eq.s32.totalorder %s29, 1
      %p173 = scmp.ne.s32.totalorder %s168, %s170
      %p174 = scmp.eq.s32.totalorder %s29, 0
      %p175 = por %p173, %p174
      %p176 = scmp.ne.s32.totalorder %s168, %s170
      %p177 = scmp.eq.s32.totalorder %s34, 1
      %p178 = por %p176, %p177
      %p179 = scmp.ne.s32.totalorder %s170, %s171
      %p180 = scmp.eq.s32.totalorder %s34, 0
      %p181 = por %p179, %p180
      %p182 = scmp.ne.s32.totalorder %s170, %s171
      %p183 = scmp.eq.s32.totalorder %s35, 1
      %p184 = por %p182, %p183
      %p186 = scmp.ne.s32.totalorder %s171, %s185
      %p187 = scmp.eq.s32.totalorder %s35, 0
      %p188 = por %p186, %p187
      %s190 = sadd.s32 %s189, 1
      %p193 = scmp.eq.s32.totalorder %s29, 1
      %p194 = scmp.ne.s32.totalorder %s189, %s191
      %p195 = scmp.eq.s32.totalorder %s29, 0
      %p196 = por %p194, %p195
      %p197 = scmp.ne.s32.totalorder %s189, %s191
      %p198 = scmp.eq.s32.totalorder %s34, 1
      %p199 = por %p197, %p198
      %p200 = scmp.ne.s32.totalorder %s191, %s192
      %p201 = scmp.eq.s32.totalorder %s34, 0
      %p202 = por %p200, %p201
      %p203 = scmp.ne.s32.totalorder %s191, %s192
      %p204 = scmp.eq.s32.totalorder %s35, 1
      %p205 = por %p203, %p204
      %p207 = scmp.ne.s32.totalorder %s192, %s206
      %p208 = scmp.eq.s32.totalorder %s35, 0
      %p209 = por %p207, %p208
      %s211 = sadd.s32 %s210, 1
      %p214 = scmp.eq.s32.totalorder %s29, 1
      %p215 = scmp.ne.s32.totalorder %s210, %s212
      %p216 = scmp.eq.s32.totalorder %s29, 0
      %p217 = por %p215, %p216
      %p218 = scmp.ne.s32.totalorder %s210, %s212
      %p219 = scmp.eq.s32.totalorder %s34, 1
      %p220 = por %p218, %p219
      %p221 = scmp.ne.s32.totalorder %s212, %s213
      %p222 = scmp.eq.s32.totalorder %s34, 0
      %p223 = por %p221, %p222
      %p224 = scmp.ne.s32.totalorder %s212, %s213
      %p225 = scmp.eq.s32.totalorder %s35, 1
      %p226 = por %p224, %p225
      %p228 = scmp.ne.s32.totalorder %s213, %s227
      %p229 = scmp.eq.s32.totalorder %s35, 0
      %p230 = por %p228, %p229
      %s232 = sadd.s32 %s231, 1
      %p235 = scmp.eq.s32.totalorder %s29, 1
      %p236 = scmp.ne.s32.totalorder %s231, %s233
      %p237 = scmp.eq.s32.totalorder %s29, 0
      %p238 = por %p236, %p237
      %p239 = scmp.ne.s32.totalorder %s231, %s233
      %p240 = scmp.eq.s32.totalorder %s34, 1
      %p241 = por %p239, %p240
      %p242 = scmp.ne.s32.totalorder %s233, %s234
      %p243 = scmp.eq.s32.totalorder %s34, 0
      %p244 = por %p242, %p243
      %p245 = scmp.ne.s32.totalorder %s233, %s234
      %p246 = scmp.eq.s32.totalorder %s35, 1
      %p247 = por %p245, %p246
      %p249 = scmp.ne.s32.totalorder %s234, %s248
      %p250 = scmp.eq.s32.totalorder %s35, 0
      %p251 = por %p249, %p250
      %s253 = sadd.s32 %s252, 1
      %p256 = scmp.eq.s32.totalorder %s29, 1
      %p257 = scmp.ne.s32.totalorder %s252, %s254
      %p258 = scmp.eq.s32.totalorder %s29, 0
      %p259 = por %p257, %p258
      %p260 = scmp.ne.s32.totalorder %s252, %s254
      %p261 = scmp.eq.s32.totalorder %s34, 1
      %p262 = por %p260, %p261
      %p263 = scmp.ne.s32.totalorder %s254, %s255
      %p264 = scmp.eq.s32.totalorder %s34, 0
      %p265 = por %p263, %p264
      %p266 = scmp.ne.s32.totalorder %s254, %s255
      %p267 = scmp.eq.s32.totalorder %s35, 1
      %p268 = por %p266, %p267
      %p270 = scmp.ne.s32.totalorder %s255, %s269
      %p271 = scmp.eq.s32.totalorder %s35, 0
      %p272 = por %p270, %p271
      %s274 = sadd.s32 %s273, 1
      %p277 = scmp.eq.s32.totalorder %s29, 1
      %p278 = scmp.ne.s32.totalorder %s273, %s275
      %p279 = scmp.eq.s32.totalorder %s29, 0
      %p280 = por %p278, %p279
      %p281 = scmp.ne.s32.totalorder %s273, %s275
      %p282 = scmp.eq.s32.totalorder %s34, 1
      %p283 = por %p281, %p282
      %p284 = scmp.ne.s32.totalorder %s275, %s276
      %p285 = scmp.eq.s32.totalorder %s34, 0
      %p286 = por %p284, %p285
      %p287 = scmp.ne.s32.totalorder %s275, %s276
      %p288 = scmp.eq.s32.totalorder %s35, 1
      %p289 = por %p287, %p288
      %p291 = scmp.ne.s32.totalorder %s276, %s290
      %p292 = scmp.eq.s32.totalorder %s35, 0
      %p293 = por %p291, %p292
      %s295 = sadd.s32 %s294, 1
      %p298 = scmp.eq.s32.totalorder %s29, 1
      %p299 = scmp.ne.s32.totalorder %s294, %s296
      %p300 = scmp.eq.s32.totalorder %s29, 0
      %p301 = por %p299, %p300
      %p302 = scmp.ne.s32.totalorder %s294, %s296
      %p303 = scmp.eq.s32.totalorder %s34, 1
      %p304 = por %p302, %p303
      %p305 = scmp.ne.s32.totalorder %s296, %s297
      %p306 = scmp.eq.s32.totalorder %s34, 0
      %p307 = por %p305, %p306
      %p308 = scmp.ne.s32.totalorder %s296, %s297
      %p309 = scmp.eq.s32.totalorder %s35, 1
      %p310 = por %p308, %p309
      %p312 = scmp.ne.s32.totalorder %s297, %s311
      %p313 = scmp.eq.s32.totalorder %s35, 0
      %p314 = por %p312, %p313
      %s316 = sadd.s32 %s315, 1
      %p319 = scmp.eq.s32.totalorder %s29, 1
      %p320 = scmp.ne.s32.totalorder %s315, %s317
      %p321 = scmp.eq.s32.totalorder %s29, 0
      %p322 = por %p320, %p321
      %p323 = scmp.ne.s32.totalorder %s315, %s317
      %p324 = scmp.eq.s32.totalorder %s34, 1
      %p325 = por %p323, %p324
      %p326 = scmp.ne.s32.totalorder %s317, %s318
      %p327 = scmp.eq.s32.totalorder %s34, 0
      %p328 = por %p326, %p327
      %p329 = scmp.ne.s32.totalorder %s317, %s318
      %p330 = scmp.eq.s32.totalorder %s35, 1
      %p331 = por %p329, %p330
      %p333 = scmp.ne.s32.totalorder %s318, %s332
      %p334 = scmp.eq.s32.totalorder %s35, 0
      %p335 = por %p333, %p334
      %s337 = sadd.s32 %s336, 1
      %p340 = scmp.eq.s32.totalorder %s29, 1
      %p341 = scmp.ne.s32.totalorder %s336, %s338
      %p342 = scmp.eq.s32.totalorder %s29, 0
      %p343 = por %p341, %p342
      %p344 = scmp.ne.s32.totalorder %s336, %s338
      %p345 = scmp.eq.s32.totalorder %s34, 1
      %p346 = por %p344, %p345
      %p347 = scmp.ne.s32.totalorder %s338, %s339
      %p348 = scmp.eq.s32.totalorder %s34, 0
      %p349 = por %p347, %p348
      %p350 = scmp.ne.s32.totalorder %s338, %s339
      %p351 = scmp.eq.s32.totalorder %s35, 1
      %p352 = por %p350, %p351
      %p354 = scmp.ne.s32.totalorder %s339, %s353
      %p355 = scmp.eq.s32.totalorder %s35, 0
      %p356 = por %p354, %p355
      %s357 = ssub.s32 %s29, %s36
      %p358 = scmp.eq.s32.totalorder %s357, 0
      %s360 = sadd.s32 %s359, 1
      %s361 = scalar_select %p358, %s359, %s360
      %p364 = pneg %p358
      %p365 = scmp.eq.s32.totalorder %s29, 1
      %p366 = por %p364, %p365
      %p367 = scmp.ne.s32.totalorder %s359, %s362
      %p368 = scmp.eq.s32.totalorder %s29, 0
      %p369 = por %p367, %p368
      %p370 = scmp.ne.s32.totalorder %s359, %s362
      %p371 = scmp.eq.s32.totalorder %s34, 1
      %p372 = por %p370, %p371
      %p373 = scmp.ne.s32.totalorder %s362, %s363
      %p374 = scmp.eq.s32.totalorder %s34, 0
      %p375 = por %p373, %p374
      %p376 = scmp.ne.s32.totalorder %s362, %s363
      %p377 = scmp.eq.s32.totalorder %s35, 1
      %p378 = por %p376, %p377
      %p380 = scmp.ne.s32.totalorder %s363, %s379
      %p381 = scmp.eq.s32.totalorder %s35, 0
      %p382 = por %p380, %p381
      %p383 = scmp.le.s32.totalorder 1, %s29
      %p384 = scmp.lt.s32.totalorder %s29, 3
      %p385 = pnand %p383, %p384
      %p386 = pneg %p385
      // Predicated region
      $region9: #{tpu_custom_call.1} parent=5 // pred_check
        _
      $region10: #{tpu_custom_call.1} parent=5 // pred_check_branch
        %388 = sbr.rel (%p385) target = $region12
      $region11: #{tpu_custom_call.1} parent=5 // pred_region
        %s389 = ssub.s32 %s29, 1
        // Predicated region
        $region13: #{tpu_custom_call.1} parent=11 // pred_check
          %p390 = pneg %p76
        $region14: #{tpu_custom_call.1} parent=11 // pred_check_branch
          %392 = sbr.rel (%p390) target = $region16
        $region15: #{tpu_custom_call.1} parent=11 // pred_region
          %s394 = ssub.s32 2048, 2048
          %395 = vsyncadd [#allocation6], %s394
          %s396 = sshll.u32 [#allocation5], 4
          %s397 = int_to_ptr.vmem [resolvable:$true] %s396
          %402 = dma.hbm_to_vmem [thread:$0]  %s1, 2048, %s397, [#allocation6], 128, 128, 8
        $region16: #{tpu_custom_call.1} parent=11 // pred_fallthru
          _
        // Predicated region
        $region17: #{tpu_custom_call.1} parent=11 // pred_check
          %p403 = pneg %p97
        $region18: #{tpu_custom_call.1} parent=11 // pred_check_branch
          %405 = sbr.rel (%p403) target = $region20
        $region19: #{tpu_custom_call.1} parent=11 // pred_region
          _
        $region20: #{tpu_custom_call.1} parent=11 // pred_fallthru
          _
        // Predicated region
        $region21: #{tpu_custom_call.1} parent=11 // pred_check
          %p406 = pneg %p118
        $region22: #{tpu_custom_call.1} parent=11 // pred_check_branch
          %408 = sbr.rel (%p406) target = $region24
        $region23: #{tpu_custom_call.1} parent=11 // pred_region
          %s410 = ssub.s32 2048, 2048
          %411 = vsyncadd [#allocation6], %s410
          %s412 = sshll.u32 [#allocation7], 4
          %s413 = int_to_ptr.vmem [resolvable:$true] %s412
          %418 = dma.hbm_to_vmem [thread:$0]  %s3, 2048, %s413, [#allocation6], 64, 64, 4
        $region24: #{tpu_custom_call.1} parent=11 // pred_fallthru
          _
        // Predicated region
        $region25: #{tpu_custom_call.1} parent=11 // pred_check
          %p419 = pneg %p139
        $region26: #{tpu_custom_call.1} parent=11 // pred_check_branch
          %421 = sbr.rel (%p419) target = $region28
        $region27: #{tpu_custom_call.1} parent=11 // pred_region
          _
        $region28: #{tpu_custom_call.1} parent=11 // pred_fallthru
          _
        // Predicated region
        $region29: #{tpu_custom_call.1} parent=11 // pred_check
          %p422 = pneg %p160
        $region30: #{tpu_custom_call.1} parent=11 // pred_check_branch
          %424 = sbr.rel (%p422) target = $region32
        $region31: #{tpu_custom_call.1} parent=11 // pred_region
          %s426 = ssub.s32 2048, 2048
          %427 = vsyncadd [#allocation9], %s426
          %s428 = sshll.u32 [#allocation8], 4
          %s429 = int_to_ptr.vmem [resolvable:$true] %s428
          %434 = dma.hbm_to_vmem [thread:$0]  %s5, 2048, %s429, [#allocation9], 128, 128, 8
        $region32: #{tpu_custom_call.1} parent=11 // pred_fallthru
          _
        // Predicated region
        $region33: #{tpu_custom_call.1} parent=11 // pred_check
          %p435 = pneg %p181
        $region34: #{tpu_custom_call.1} parent=11 // pred_check_branch
          %437 = sbr.rel (%p435) target = $region36
        $region35: #{tpu_custom_call.1} parent=11 // pred_region
          _
        $region36: #{tpu_custom_call.1} parent=11 // pred_fallthru
          _
        // Predicated region
        $region37: #{tpu_custom_call.1} parent=11 // pred_check
          %p438 = pneg %p202
        $region38: #{tpu_custom_call.1} parent=11 // pred_check_branch
          %440 = sbr.rel (%p438) target = $region40
        $region39: #{tpu_custom_call.1} parent=11 // pred_region
          %s442 = ssub.s32 2048, 2048
          %443 = vsyncadd [#allocation9], %s442
          %s444 = sshll.u32 [#allocation10], 4
          %s445 = int_to_ptr.vmem [resolvable:$true] %s444
          %450 = dma.hbm_to_vmem [thread:$0]  %s7, 2048, %s445, [#allocation9], 64, 64, 4
        $region40: #{tpu_custom_call.1} parent=11 // pred_fallthru
          _
        // Predicated region
        $region41: #{tpu_custom_call.1} parent=11 // pred_check
          %p451 = pneg %p223
        $region42: #{tpu_custom_call.1} parent=11 // pred_check_branch
          %453 = sbr.rel (%p451) target = $region44
        $region43: #{tpu_custom_call.1} parent=11 // pred_region
          _
        $region44: #{tpu_custom_call.1} parent=11 // pred_fallthru
          _
        // Predicated region
        $region45: #{tpu_custom_call.1} parent=11 // pred_check
          %p454 = pneg %p244
        $region46: #{tpu_custom_call.1} parent=11 // pred_check_branch
          %456 = sbr.rel (%p454) target = $region48
        $region47: #{tpu_custom_call.1} parent=11 // pred_region
          %s458 = ssub.s32 2048, 2048
          %459 = vsyncadd [#allocation12], %s458
          %s460 = sshll.u32 [#allocation11], 4
          %s461 = int_to_ptr.vmem [resolvable:$true] %s460
          %466 = dma.hbm_to_vmem [thread:$0]  %s9, 2048, %s461, [#allocation12], 128, 128, 8
        $region48: #{tpu_custom_call.1} parent=11 // pred_fallthru
          _
        // Predicated region
        $region49: #{tpu_custom_call.1} parent=11 // pred_check
          %p467 = pneg %p265
        $region50: #{tpu_custom_call.1} parent=11 // pred_check_branch
          %469 = sbr.rel (%p467) target = $region52
        $region51: #{tpu_custom_call.1} parent=11 // pred_region
          _
        $region52: #{tpu_custom_call.1} parent=11 // pred_fallthru
          _
        // Predicated region
        $region53: #{tpu_custom_call.1} parent=11 // pred_check
          %p470 = pneg %p286
        $region54: #{tpu_custom_call.1} parent=11 // pred_check_branch
          %472 = sbr.rel (%p470) target = $region56
        $region55: #{tpu_custom_call.1} parent=11 // pred_region
          %s474 = ssub.s32 2048, 2048
          %475 = vsyncadd [#allocation12], %s474
          %s476 = sshll.u32 [#allocation13], 4
          %s477 = int_to_ptr.vmem [resolvable:$true] %s476
          %482 = dma.hbm_to_vmem [thread:$0]  %s11, 2048, %s477, [#allocation12], 64, 64, 4
        $region56: #{tpu_custom_call.1} parent=11 // pred_fallthru
          _
        // Predicated region
        $region57: #{tpu_custom_call.1} parent=11 // pred_check
          %p483 = pneg %p307
        $region58: #{tpu_custom_call.1} parent=11 // pred_check_branch
          %485 = sbr.rel (%p483) target = $region60
        $region59: #{tpu_custom_call.1} parent=11 // pred_region
          _
        $region60: #{tpu_custom_call.1} parent=11 // pred_fallthru
          _
        // Predicated region
        $region61: #{tpu_custom_call.1} parent=11 // pred_check
          %p486 = pneg %p328
        $region62: #{tpu_custom_call.1} parent=11 // pred_check_branch
          %488 = sbr.rel (%p486) target = $region64
        $region63: #{tpu_custom_call.1} parent=11 // pred_region
          _
        $region64: #{tpu_custom_call.1} parent=11 // pred_fallthru
          _
        // Predicated region
        $region65: #{tpu_custom_call.1} parent=11 // pred_check
          %p489 = pneg %p349
        $region66: #{tpu_custom_call.1} parent=11 // pred_check_branch
          %491 = sbr.rel (%p489) target = $region68
        $region67: #{tpu_custom_call.1} parent=11 // pred_region
          _
        $region68: #{tpu_custom_call.1} parent=11 // pred_fallthru
          _
      $region12: #{tpu_custom_call.1} parent=5 // pred_fallthru
        _
      %p492 = scmp.lt.s32.totalorder %s29, 2
      // Predicated region
      $region69: #{tpu_custom_call.1} parent=5 // pred_check
        %p493 = pneg %p492
      $region70: #{tpu_custom_call.1} parent=5 // pred_check_branch
        %495 = sbr.rel (%p493) target = $region72
      $region71: #{tpu_custom_call.1} parent=5 // pred_region
        // Predicated region
        $region73: #{tpu_custom_call.1} parent=71 // pred_check
          %p496 = pneg %p49
        $region74: #{tpu_custom_call.1} parent=71 // pred_check_branch
          %498 = sbr.rel (%p496) target = $region76
        $region75: #{tpu_custom_call.1} parent=71 // pred_region
          %s499 = sand.u32 %s39, 1
          %s500 = scalar_lea.sflag [#allocation4], %s499
          %s501 = sand.u32 %s39, 1
          %s502 = smul.addr %s501, 128
          %s503 = scalar_lea.vmem [#allocation3], %s502
          %s504 = smul.u32 16, %s29
          %s506 = ssub.s32 2048, 2048
          %507 = vsyncadd %s500, %s506
          %s508 = smul.addr %s504, 128
          %s509 = scalar_lea.hbm %s0, %s508
          %s510 = sshll.u32 %s503, 4
          %s511 = int_to_ptr.vmem [resolvable:$true] %s510
          %516 = dma.hbm_to_vmem [thread:$0]  %s509, 2048, %s511, %s500, 128, 128, 8
        $region76: #{tpu_custom_call.1} parent=71 // pred_fallthru
          _
      $region72: #{tpu_custom_call.1} parent=5 // pred_fallthru
        _
      %p517 = scmp.le.s32.totalorder 1, %s29
      %p518 = scmp.lt.s32.totalorder %s29, 3
      %p519 = pnand %p517, %p518
      %p520 = pneg %p519
      // Predicated region
      $region77: #{tpu_custom_call.1} parent=5 // pred_check
        _
      $region78: #{tpu_custom_call.1} parent=5 // pred_check_branch
        %522 = sbr.rel (%p519) target = $region80
      $region79: #{tpu_custom_call.1} parent=5 // pred_region
        %s523 = ssub.s32 %s29, 1
        %s524 = sand.u32 %s42, 1
        %s525 = scalar_lea.sflag [#allocation4], %s524
        %s526 = sand.u32 %s42, 1
        %s527 = smul.addr %s526, 128
        %s528 = scalar_lea.vmem [#allocation3], %s527
        // Predicated region
        $region81: #{tpu_custom_call.1} parent=79 // pred_check
          %p529 = pneg %p55
        $region82: #{tpu_custom_call.1} parent=79 // pred_check_branch
          %531 = sbr.rel (%p529) target = $region84
        $region83: #{tpu_custom_call.1} parent=79 // pred_region
          %532 = dma.done %s525, 2048
        $region84: #{tpu_custom_call.1} parent=79 // pred_fallthru
          _
        // Predicated region
        $region85: #{tpu_custom_call.1} parent=79 // pred_check
          %p533 = pneg %p76
        $region86: #{tpu_custom_call.1} parent=79 // pred_check_branch
          %535 = sbr.rel (%p533) target = $region88
        $region87: #{tpu_custom_call.1} parent=79 // pred_region
          %536 = dma.done [#allocation6], 2048
        $region88: #{tpu_custom_call.1} parent=79 // pred_fallthru
          _
        // Predicated region
        $region89: #{tpu_custom_call.1} parent=79 // pred_check
          %p537 = pneg %p118
        $region90: #{tpu_custom_call.1} parent=79 // pred_check_branch
          %539 = sbr.rel (%p537) target = $region92
        $region91: #{tpu_custom_call.1} parent=79 // pred_region
          %540 = dma.done [#allocation6], 2048
        $region92: #{tpu_custom_call.1} parent=79 // pred_fallthru
          _
        // Predicated region
        $region93: #{tpu_custom_call.1} parent=79 // pred_check
          %p541 = pneg %p160
        $region94: #{tpu_custom_call.1} parent=79 // pred_check_branch
          %543 = sbr.rel (%p541) target = $region96
        $region95: #{tpu_custom_call.1} parent=79 // pred_region
          %544 = dma.done [#allocation9], 2048
        $region96: #{tpu_custom_call.1} parent=79 // pred_fallthru
          _
        // Predicated region
        $region97: #{tpu_custom_call.1} parent=79 // pred_check
          %p545 = pneg %p202
        $region98: #{tpu_custom_call.1} parent=79 // pred_check_branch
          %547 = sbr.rel (%p545) target = $region100
        $region99: #{tpu_custom_call.1} parent=79 // pred_region
          %548 = dma.done [#allocation9], 2048
        $region100: #{tpu_custom_call.1} parent=79 // pred_fallthru
          _
        // Predicated region
        $region101: #{tpu_custom_call.1} parent=79 // pred_check
          %p549 = pneg %p244
        $region102: #{tpu_custom_call.1} parent=79 // pred_check_branch
          %551 = sbr.rel (%p549) target = $region104
        $region103: #{tpu_custom_call.1} parent=79 // pred_region
          %552 = dma.done [#allocation12], 2048
        $region104: #{tpu_custom_call.1} parent=79 // pred_fallthru
          _
        // Predicated region
        $region105: #{tpu_custom_call.1} parent=79 // pred_check
          %p553 = pneg %p286
        $region106: #{tpu_custom_call.1} parent=79 // pred_check_branch
          %555 = sbr.rel (%p553) target = $region108
        $region107: #{tpu_custom_call.1} parent=79 // pred_region
          %556 = dma.done [#allocation12], 2048
        $region108: #{tpu_custom_call.1} parent=79 // pred_fallthru
          _
        %s557 = sand.u32 %s42, 1
        %s558 = scalar_lea.sflag [#allocation4], %s557
        %s559 = sand.u32 %s42, 1
        %s560 = smul.addr %s559, 128
        %s561 = scalar_lea.vmem [#allocation3], %s560
        %p562 = pneg %p55
        %p563 = pneg %p52
        %p564 = pneg %p76
        %p565 = pneg %p73
        %p566 = pneg %p97
        %p567 = pneg %p94
        %p568 = pneg %p118
        %p569 = pneg %p115
        %p570 = pneg %p139
        %p571 = pneg %p136
        %p572 = pneg %p160
        %p573 = pneg %p157
        %p574 = pneg %p181
        %p575 = pneg %p178
        %p576 = pneg %p202
        %p577 = pneg %p199
        %p578 = pneg %p223
        %p579 = pneg %p220
        %p580 = pneg %p244
        %p581 = pneg %p241
        %p582 = pneg %p265
        %p583 = pneg %p262
        %p584 = pneg %p286
        %p585 = pneg %p283
        %p586 = pneg %p307
        %p587 = pneg %p304
        %p588 = pneg %p328
        %p589 = pneg %p325
        %p590 = pneg %p349
        %p591 = pneg %p346
        %p592 = pneg %p375
        %p593 = pneg %p372
        %s594 = smul.u32 16, %s34
        %p595 = scmp.lt.s32.totalorder %s594, 31
        %s596 = scalar_select %p595, %s594, 31
        %s597 = smul.addr %s596, 8
        %s598 = scalar_lea.vmem %s15, %s597
        %s599 = smul.u32 16, %s34
        %s600 = smul.u32 16, %s34
        %p601 = scmp.lt.s32.totalorder %s600, 31
        %s602 = scalar_select %p601, %s600, 31
        %s603 = smul.addr %s602, 8
        %s604 = scalar_lea.vmem %s15, %s603
        %s605 = smul.u32 16, %s34
        %v607 = vld [vmem:[%s528] sm:$0xff]
        %v608 = vld [vmem:[%s528 + $0x8] sm:$0xff]
        %v609 = vld [vmem:[%s528 + $0x10] sm:$0xff]
        %v610 = vld [vmem:[%s528 + $0x18] sm:$0xff]
        %v611 = vld [vmem:[%s528 + $0x20] sm:$0xff]
        %v612 = vld [vmem:[%s528 + $0x28] sm:$0xff]
        %v613 = vld [vmem:[%s528 + $0x30] sm:$0xff]
        %v614 = vld [vmem:[%s528 + $0x38] sm:$0xff]
        %v615 = vld [vmem:[%s528 + $0x40] sm:$0xff]
        %v616 = vld [vmem:[%s528 + $0x48] sm:$0xff]
        %v617 = vld [vmem:[%s528 + $0x50] sm:$0xff]
        %v618 = vld [vmem:[%s528 + $0x58] sm:$0xff]
        %v619 = vld [vmem:[%s528 + $0x60] sm:$0xff]
        %v620 = vld [vmem:[%s528 + $0x68] sm:$0xff]
        %v621 = vld [vmem:[%s528 + $0x70] sm:$0xff]
        %v622 = vld [vmem:[%s528 + $0x78] sm:$0xff]
        %v623 = vpack.c.bf16 %v608, %v607
        %v624 = vpack.c.bf16 %v610, %v609
        %v625 = vpack.c.bf16 %v612, %v611
        %v626 = vpack.c.bf16 %v614, %v613
        %v627 = vpack.c.bf16 %v616, %v615
        %v628 = vpack.c.bf16 %v618, %v617
        %v629 = vpack.c.bf16 %v620, %v619
        %v630 = vpack.c.bf16 %v622, %v621
        %v631 = vld [vmem:[#allocation5] sm:$0xff]
        %v632 = vld [vmem:[#allocation5 + $0x8] sm:$0xff]
        %v633 = vld [vmem:[#allocation5 + $0x10] sm:$0xff]
        %v634 = vld [vmem:[#allocation5 + $0x18] sm:$0xff]
        %v635 = vld [vmem:[#allocation5 + $0x20] sm:$0xff]
        %v636 = vld [vmem:[#allocation5 + $0x28] sm:$0xff]
        %v637 = vld [vmem:[#allocation5 + $0x30] sm:$0xff]
        %v638 = vld [vmem:[#allocation5 + $0x38] sm:$0xff]
        %v639 = vld [vmem:[#allocation5 + $0x40] sm:$0xff]
        %v640 = vld [vmem:[#allocation5 + $0x48] sm:$0xff]
        %v641 = vld [vmem:[#allocation5 + $0x50] sm:$0xff]
        %v642 = vld [vmem:[#allocation5 + $0x58] sm:$0xff]
        %v643 = vld [vmem:[#allocation5 + $0x60] sm:$0xff]
        %v644 = vld [vmem:[#allocation5 + $0x68] sm:$0xff]
        %v645 = vld [vmem:[#allocation5 + $0x70] sm:$0xff]
        %v646 = vld [vmem:[#allocation5 + $0x78] sm:$0xff]
        %v647 = vld [vmem:[%s2] sm:$0x3]
        %v649 = vlaneseq
        %v650 = vshrl.u32 %v649, 7
        %v651 = vsub.s32 0, %v650
        %v652 = vrot.slane %v647, %v651
        %v653 = vlaneseq
        %v654 = vshrl.u32 %v653, 7
        %v655 = vsub.s32 1, %v654
        %v656 = vrot.slane %v647, %v655
        %v675 = vunpack.c.l.b16 %v631
        %v676 = vunpack.c.h.b16 %v631
        %v677 = vunpack.c.l.b16 %v632
        %v678 = vunpack.c.h.b16 %v632
        %v679 = vunpack.c.l.b16 %v633
        %v680 = vunpack.c.h.b16 %v633
        %v681 = vunpack.c.l.b16 %v634
        %v682 = vunpack.c.h.b16 %v634
        %v683 = vunpack.c.l.b16 %v635
        %v684 = vunpack.c.h.b16 %v635
        %v685 = vunpack.c.l.b16 %v636
        %v686 = vunpack.c.h.b16 %v636
        %v687 = vunpack.c.l.b16 %v637
        %v688 = vunpack.c.h.b16 %v637
        %v689 = vunpack.c.l.b16 %v638
        %v690 = vunpack.c.h.b16 %v638
        %v691 = vunpack.c.l.b16 %v639
        %v692 = vunpack.c.h.b16 %v639
        %v693 = vunpack.c.l.b16 %v640
        %v694 = vunpack.c.h.b16 %v640
        %v695 = vunpack.c.l.b16 %v641
        %v696 = vunpack.c.h.b16 %v641
        %v697 = vunpack.c.l.b16 %v642
        %v698 = vunpack.c.h.b16 %v642
        %v699 = vunpack.c.l.b16 %v643
        %v700 = vunpack.c.h.b16 %v643
        %v701 = vunpack.c.l.b16 %v644
        %v702 = vunpack.c.h.b16 %v644
        %v703 = vunpack.c.l.b16 %v645
        %v704 = vunpack.c.h.b16 %v645
        %v705 = vunpack.c.l.b16 %v646
        %v706 = vunpack.c.h.b16 %v646
        %v707 = vpack.c.b16 %v677, %v675
        %v708 = vpack.c.b16 %v678, %v676
        %v709 = vpack.c.b16 %v681, %v679
        %v710 = vpack.c.b16 %v682, %v680
        %v711 = vpack.c.b16 %v685, %v683
        %v712 = vpack.c.b16 %v686, %v684
        %v713 = vpack.c.b16 %v689, %v687
        %v714 = vpack.c.b16 %v690, %v688
        %v715 = vpack.c.b16 %v693, %v691
        %v716 = vpack.c.b16 %v694, %v692
        %v717 = vpack.c.b16 %v697, %v695
        %v718 = vpack.c.b16 %v698, %v696
        %v719 = vpack.c.b16 %v701, %v699
        %v720 = vpack.c.b16 %v702, %v700
        %v721 = vpack.c.b16 %v705, %v703
        %v722 = vpack.c.b16 %v706, %v704
        %739 = vmatprep.subr.bf16.mxu0 %v722
        %740 = vmatpush1.bf16.msra.mxu0 %v721
        %741 = vmatprep.subr.bf16.mxu0 %v720
        %742 = vmatpush1.bf16.msra.mxu0 %v719
        %743 = vmatprep.subr.bf16.mxu0 %v718
        %744 = vmatpush1.bf16.msra.mxu0 %v717
        %745 = vmatprep.subr.bf16.mxu0 %v716
        %746 = vmatpush1.bf16.msra.mxu0 %v715
        %747 = vmatprep.subr.bf16.mxu0 %v714
        %748 = vmatpush1.bf16.msra.mxu0 %v713
        %749 = vmatprep.subr.bf16.mxu0 %v712
        %750 = vmatpush1.bf16.msra.mxu0 %v711
        %751 = vmatprep.subr.bf16.mxu0 %v710
        %752 = vmatpush1.bf16.msra.mxu0 %v709
        %753 = vmatprep.subr.bf16.mxu0 %v708
        %754 = vmatpush1.bf16.msra.mxu0 %v707
        %755 = vmatprep.subr.bf16.mxu0 0
        %756 = vmatpush2.bf16.msra.mxu0 0
        %757 = vmatprep.subr.bf16.mxu0 0
        %758 = vmatpush2.bf16.msra.mxu0 0
        %759 = vmatprep.subr.bf16.mxu0 0
        %760 = vmatpush2.bf16.msra.mxu0 0
        %761 = vmatprep.subr.bf16.mxu0 0
        %762 = vmatpush2.bf16.msra.mxu0 0
        %763 = vmatprep.subr.bf16.mxu0 0
        %764 = vmatpush2.bf16.msra.mxu0 0
        %765 = vmatprep.subr.bf16.mxu0 0
        %766 = vmatpush2.bf16.msra.mxu0 0
        %767 = vmatprep.subr.bf16.mxu0 0
        %768 = vmatpush2.bf16.msra.mxu0 0
        %769 = vmatprep.subr.bf16.mxu0 0
        %770 = vmatpush2.bf16.msra.mxu0 0
        %771 = vmatprep.mubr.bf16.mxu0 0
        %772 = vmatmul.mubr.bf16.gmra.mxu0 %v623
        %v773 = vpop.f32.mrf.mxu0
        %v774 = vadd.f32 %v652, %v773
        %v775 = vpop.f32.mrf.mxu0
        %v776 = vadd.f32 %v656, %v775
        %v777 = vpop.f32.mrf.mxu0
        %v778 = vadd.f32 %v652, %v777
        %v779 = vpop.f32.mrf.mxu0
        %v780 = vadd.f32 %v656, %v779
        %781 = vmatprep.mubr.bf16.mxu0 0
        %782 = vmatmul.mubr.bf16.gmra.mxu0 %v624
        %v783 = vpop.f32.mrf.mxu0
        %v784 = vadd.f32 %v652, %v783
        %v785 = vpop.f32.mrf.mxu0
        %v786 = vadd.f32 %v656, %v785
        %v787 = vpop.f32.mrf.mxu0
        %v788 = vadd.f32 %v652, %v787
        %v789 = vpop.f32.mrf.mxu0
        %v790 = vadd.f32 %v656, %v789
        %791 = vmatprep.mubr.bf16.mxu0 0
        %792 = vmatmul.mubr.bf16.gmra.mxu0 %v625
        %v793 = vpop.f32.mrf.mxu0
        %v794 = vadd.f32 %v652, %v793
        %v795 = vpop.f32.mrf.mxu0
        %v796 = vadd.f32 %v656, %v795
        %v797 = vpop.f32.mrf.mxu0
        %v798 = vadd.f32 %v652, %v797
        %v799 = vpop.f32.mrf.mxu0
        %v800 = vadd.f32 %v656, %v799
        %801 = vmatprep.mubr.bf16.mxu0 0
        %802 = vmatmul.mubr.bf16.gmra.mxu0 %v626
        %v803 = vpop.f32.mrf.mxu0
        %v804 = vadd.f32 %v652, %v803
        %v805 = vpop.f32.mrf.mxu0
        %v806 = vadd.f32 %v656, %v805
        %v807 = vpop.f32.mrf.mxu0
        %v808 = vadd.f32 %v652, %v807
        %v809 = vpop.f32.mrf.mxu0
        %v810 = vadd.f32 %v656, %v809
        %811 = vmatprep.mubr.bf16.mxu0 0
        %812 = vmatmul.mubr.bf16.gmra.mxu0 %v627
        %v813 = vpop.f32.mrf.mxu0
        %v814 = vadd.f32 %v652, %v813
        %v815 = vpop.f32.mrf.mxu0
        %v816 = vadd.f32 %v656, %v815
        %v817 = vpop.f32.mrf.mxu0
        %v818 = vadd.f32 %v652, %v817
        %v819 = vpop.f32.mrf.mxu0
        %v820 = vadd.f32 %v656, %v819
        %821 = vmatprep.mubr.bf16.mxu0 0
        %822 = vmatmul.mubr.bf16.gmra.mxu0 %v628
        %v823 = vpop.f32.mrf.mxu0
        %v824 = vadd.f32 %v652, %v823
        %v825 = vpop.f32.mrf.mxu0
        %v826 = vadd.f32 %v656, %v825
        %v827 = vpop.f32.mrf.mxu0
        %v828 = vadd.f32 %v652, %v827
        %v829 = vpop.f32.mrf.mxu0
        %v830 = vadd.f32 %v656, %v829
        %831 = vmatprep.mubr.bf16.mxu0 0
        %832 = vmatmul.mubr.bf16.gmra.mxu0 %v629
        %v833 = vpop.f32.mrf.mxu0
        %v834 = vadd.f32 %v652, %v833
        %v835 = vpop.f32.mrf.mxu0
        %v836 = vadd.f32 %v656, %v835
        %v837 = vpop.f32.mrf.mxu0
        %v838 = vadd.f32 %v652, %v837
        %v839 = vpop.f32.mrf.mxu0
        %v840 = vadd.f32 %v656, %v839
        %841 = vmatprep.mubr.bf16.mxu0 0
        %842 = vmatmul.mubr.bf16.gmra.mxu0 %v630
        %v843 = vpop.f32.mrf.mxu0
        %v844 = vadd.f32 %v652, %v843
        %v845 = vpop.f32.mrf.mxu0
        %v846 = vadd.f32 %v656, %v845
        %v847 = vpop.f32.mrf.mxu0
        %v848 = vadd.f32 %v652, %v847
        %v849 = vpop.f32.mrf.mxu0
        %v850 = vadd.f32 %v656, %v849
        %851 = vdwg.mxu0
        %v852 = vmax.f32 %v774, 0.0
        %v853 = vmax.f32 %v776, 0.0
        %v854 = vmax.f32 %v778, 0.0
        %v855 = vmax.f32 %v780, 0.0
        %v856 = vmax.f32 %v784, 0.0
        %v857 = vmax.f32 %v786, 0.0
        %v858 = vmax.f32 %v788, 0.0
        %v859 = vmax.f32 %v790, 0.0
        %v860 = vmax.f32 %v794, 0.0
        %v861 = vmax.f32 %v796, 0.0
        %v862 = vmax.f32 %v798, 0.0
        %v863 = vmax.f32 %v800, 0.0
        %v864 = vmax.f32 %v804, 0.0
        %v865 = vmax.f32 %v806, 0.0
        %v866 = vmax.f32 %v808, 0.0
        %v867 = vmax.f32 %v810, 0.0
        %v868 = vmax.f32 %v814, 0.0
        %v869 = vmax.f32 %v816, 0.0
        %v870 = vmax.f32 %v818, 0.0
        %v871 = vmax.f32 %v820, 0.0
        %v872 = vmax.f32 %v824, 0.0
        %v873 = vmax.f32 %v826, 0.0
        %v874 = vmax.f32 %v828, 0.0
        %v875 = vmax.f32 %v830, 0.0
        %v876 = vmax.f32 %v834, 0.0
        %v877 = vmax.f32 %v836, 0.0
        %v878 = vmax.f32 %v838, 0.0
        %v879 = vmax.f32 %v840, 0.0
        %v880 = vmax.f32 %v844, 0.0
        %v881 = vmax.f32 %v846, 0.0
        %v882 = vmax.f32 %v848, 0.0
        %v883 = vmax.f32 %v850, 0.0
        %v884 = vpack.c.bf16 %v854, %v852
        %v885 = vpack.c.bf16 %v855, %v853
        %v886 = vpack.c.bf16 %v858, %v856
        %v887 = vpack.c.bf16 %v859, %v857
        %v888 = vpack.c.bf16 %v862, %v860
        %v889 = vpack.c.bf16 %v863, %v861
        %v890 = vpack.c.bf16 %v866, %v864
        %v891 = vpack.c.bf16 %v867, %v865
        %v892 = vpack.c.bf16 %v870, %v868
        %v893 = vpack.c.bf16 %v871, %v869
        %v894 = vpack.c.bf16 %v874, %v872
        %v895 = vpack.c.bf16 %v875, %v873
        %v896 = vpack.c.bf16 %v878, %v876
        %v897 = vpack.c.bf16 %v879, %v877
        %v898 = vpack.c.bf16 %v882, %v880
        %v899 = vpack.c.bf16 %v883, %v881
        %v900 = vld [vmem:[#allocation7] sm:$0xf]
        %v901 = vld [vmem:[#allocation7 + $0x4] sm:$0xf]
        %v902 = vld [vmem:[#allocation7 + $0x8] sm:$0xf]
        %v903 = vld [vmem:[#allocation7 + $0xc] sm:$0xf]
        %v904 = vld [vmem:[#allocation7 + $0x10] sm:$0xf]
        %v905 = vld [vmem:[#allocation7 + $0x14] sm:$0xf]
        %v906 = vld [vmem:[#allocation7 + $0x18] sm:$0xf]
        %v907 = vld [vmem:[#allocation7 + $0x1c] sm:$0xf]
        %v908 = vld [vmem:[#allocation7 + $0x20] sm:$0xf]
        %v909 = vld [vmem:[#allocation7 + $0x24] sm:$0xf]
        %v910 = vld [vmem:[#allocation7 + $0x28] sm:$0xf]
        %v911 = vld [vmem:[#allocation7 + $0x2c] sm:$0xf]
        %v912 = vld [vmem:[#allocation7 + $0x30] sm:$0xf]
        %v913 = vld [vmem:[#allocation7 + $0x34] sm:$0xf]
        %v914 = vld [vmem:[#allocation7 + $0x38] sm:$0xf]
        %v915 = vld [vmem:[#allocation7 + $0x3c] sm:$0xf]
        %v916 = vld [vmem:[#allocation7 + $0x40] sm:$0xf]
        %v917 = vld [vmem:[#allocation7 + $0x44] sm:$0xf]
        %v918 = vld [vmem:[#allocation7 + $0x48] sm:$0xf]
        %v919 = vld [vmem:[#allocation7 + $0x4c] sm:$0xf]
        %v920 = vld [vmem:[#allocation7 + $0x50] sm:$0xf]
        %v921 = vld [vmem:[#allocation7 + $0x54] sm:$0xf]
        %v922 = vld [vmem:[#allocation7 + $0x58] sm:$0xf]
        %v923 = vld [vmem:[#allocation7 + $0x5c] sm:$0xf]
        %v924 = vld [vmem:[#allocation7 + $0x60] sm:$0xf]
        %v925 = vld [vmem:[#allocation7 + $0x64] sm:$0xf]
        %v926 = vld [vmem:[#allocation7 + $0x68] sm:$0xf]
        %v927 = vld [vmem:[#allocation7 + $0x6c] sm:$0xf]
        %v928 = vld [vmem:[#allocation7 + $0x70] sm:$0xf]
        %v929 = vld [vmem:[#allocation7 + $0x74] sm:$0xf]
        %v930 = vld [vmem:[#allocation7 + $0x78] sm:$0xf]
        %v931 = vld [vmem:[#allocation7 + $0x7c] sm:$0xf]
        %v932 = vld [vmem:[%s4] sm:$0x1]
        %v934 = vlaneseq
        %v935 = vshrl.u32 %v934, 7
        %v936 = vsub.s32 0, %v935
        %v937 = vrot.slane %v932, %v936
        %v971 = vunpack.c.l.b16 %v900
        %v972 = vunpack.c.l.b16 %v901
        %v973 = vunpack.c.l.b16 %v902
        %v974 = vunpack.c.l.b16 %v903
        %v975 = vunpack.c.l.b16 %v904
        %v976 = vunpack.c.l.b16 %v905
        %v977 = vunpack.c.l.b16 %v906
        %v978 = vunpack.c.l.b16 %v907
        %v979 = vunpack.c.l.b16 %v908
        %v980 = vunpack.c.l.b16 %v909
        %v981 = vunpack.c.l.b16 %v910
        %v982 = vunpack.c.l.b16 %v911
        %v983 = vunpack.c.l.b16 %v912
        %v984 = vunpack.c.l.b16 %v913
        %v985 = vunpack.c.l.b16 %v914
        %v986 = vunpack.c.l.b16 %v915
        %v987 = vunpack.c.l.b16 %v916
        %v988 = vunpack.c.l.b16 %v917
        %v989 = vunpack.c.l.b16 %v918
        %v990 = vunpack.c.l.b16 %v919
        %v991 = vunpack.c.l.b16 %v920
        %v992 = vunpack.c.l.b16 %v921
        %v993 = vunpack.c.l.b16 %v922
        %v994 = vunpack.c.l.b16 %v923
        %v995 = vunpack.c.l.b16 %v924
        %v996 = vunpack.c.l.b16 %v925
        %v997 = vunpack.c.l.b16 %v926
        %v998 = vunpack.c.l.b16 %v927
        %v999 = vunpack.c.l.b16 %v928
        %v1000 = vunpack.c.l.b16 %v929
        %v1001 = vunpack.c.l.b16 %v930
        %v1002 = vunpack.c.l.b16 %v931
        %v1003 = vpack.c.b16 %v972, %v971
        %v1004 = vpack.c.b16 %v974, %v973
        %v1005 = vpack.c.b16 %v976, %v975
        %v1006 = vpack.c.b16 %v978, %v977
        %v1007 = vpack.c.b16 %v980, %v979
        %v1008 = vpack.c.b16 %v982, %v981
        %v1009 = vpack.c.b16 %v984, %v983
        %v1010 = vpack.c.b16 %v986, %v985
        %v1011 = vpack.c.b16 %v988, %v987
        %v1012 = vpack.c.b16 %v990, %v989
        %v1013 = vpack.c.b16 %v992, %v991
        %v1014 = vpack.c.b16 %v994, %v993
        %v1015 = vpack.c.b16 %v996, %v995
        %v1016 = vpack.c.b16 %v998, %v997
        %v1017 = vpack.c.b16 %v1000, %v999
        %v1018 = vpack.c.b16 %v1002, %v1001
        %1035 = vmatprep.subr.bf16.mxu0 0
        %1036 = vmatpush1.bf16.msra.mxu0 %v1010
        %1037 = vmatprep.subr.bf16.mxu0 0
        %1038 = vmatpush1.bf16.msra.mxu0 %v1009
        %1039 = vmatprep.subr.bf16.mxu0 0
        %1040 = vmatpush1.bf16.msra.mxu0 %v1008
        %1041 = vmatprep.subr.bf16.mxu0 0
        %1042 = vmatpush1.bf16.msra.mxu0 %v1007
        %1043 = vmatprep.subr.bf16.mxu0 0
        %1044 = vmatpush1.bf16.msra.mxu0 %v1006
        %1045 = vmatprep.subr.bf16.mxu0 0
        %1046 = vmatpush1.bf16.msra.mxu0 %v1005
        %1047 = vmatprep.subr.bf16.mxu0 0
        %1048 = vmatpush1.bf16.msra.mxu0 %v1004
        %1049 = vmatprep.subr.bf16.mxu0 0
        %1050 = vmatpush1.bf16.msra.mxu0 %v1003
        %1051 = vmatprep.subr.bf16.mxu0 0
        %1052 = vmatpush2.bf16.msra.mxu0 %v1018
        %1053 = vmatprep.subr.bf16.mxu0 0
        %1054 = vmatpush2.bf16.msra.mxu0 %v1017
        %1055 = vmatprep.subr.bf16.mxu0 0
        %1056 = vmatpush2.bf16.msra.mxu0 %v1016
        %1057 = vmatprep.subr.bf16.mxu0 0
        %1058 = vmatpush2.bf16.msra.mxu0 %v1015
        %1059 = vmatprep.subr.bf16.mxu0 0
        %1060 = vmatpush2.bf16.msra.mxu0 %v1014
        %1061 = vmatprep.subr.bf16.mxu0 0
        %1062 = vmatpush2.bf16.msra.mxu0 %v1013
        %1063 = vmatprep.subr.bf16.mxu0 0
        %1064 = vmatpush2.bf16.msra.mxu0 %v1012
        %1065 = vmatprep.subr.bf16.mxu0 0
        %1066 = vmatpush2.bf16.msra.mxu0 %v1011
        %1067 = vmatprep.mubr.bf16.mxu0 %v885
        %1068 = vmatmul.mubr.bf16.gmra.mxu0 %v884
        %v1069 = vpop.f32.mrf.mxu0
        %v1070 = vadd.f32 %v937, %v1069
        %v1071 = vpop.f32.mrf.mxu0
        %v1072 = vpop.f32.mrf.mxu0
        %v1073 = vadd.f32 %v937, %v1072
        %v1074 = vpop.f32.mrf.mxu0
        %1075 = vmatprep.mubr.bf16.mxu0 %v887
        %1076 = vmatmul.mubr.bf16.gmra.mxu0 %v886
        %v1077 = vpop.f32.mrf.mxu0
        %v1078 = vadd.f32 %v937, %v1077
        %v1079 = vpop.f32.mrf.mxu0
        %v1080 = vpop.f32.mrf.mxu0
        %v1081 = vadd.f32 %v937, %v1080
        %v1082 = vpop.f32.mrf.mxu0
        %1083 = vmatprep.mubr.bf16.mxu0 %v889
        %1084 = vmatmul.mubr.bf16.gmra.mxu0 %v888
        %v1085 = vpop.f32.mrf.mxu0
        %v1086 = vadd.f32 %v937, %v1085
        %v1087 = vpop.f32.mrf.mxu0
        %v1088 = vpop.f32.mrf.mxu0
        %v1089 = vadd.f32 %v937, %v1088
        %v1090 = vpop.f32.mrf.mxu0
        %1091 = vmatprep.mubr.bf16.mxu0 %v891
        %1092 = vmatmul.mubr.bf16.gmra.mxu0 %v890
        %v1093 = vpop.f32.mrf.mxu0
        %v1094 = vadd.f32 %v937, %v1093
        %v1095 = vpop.f32.mrf.mxu0
        %v1096 = vpop.f32.mrf.mxu0
        %v1097 = vadd.f32 %v937, %v1096
        %v1098 = vpop.f32.mrf.mxu0
        %1099 = vmatprep.mubr.bf16.mxu0 %v893
        %1100 = vmatmul.mubr.bf16.gmra.mxu0 %v892
        %v1101 = vpop.f32.mrf.mxu0
        %v1102 = vadd.f32 %v937, %v1101
        %v1103 = vpop.f32.mrf.mxu0
        %v1104 = vpop.f32.mrf.mxu0
        %v1105 = vadd.f32 %v937, %v1104
        %v1106 = vpop.f32.mrf.mxu0
        %1107 = vmatprep.mubr.bf16.mxu0 %v895
        %1108 = vmatmul.mubr.bf16.gmra.mxu0 %v894
        %v1109 = vpop.f32.mrf.mxu0
        %v1110 = vadd.f32 %v937, %v1109
        %v1111 = vpop.f32.mrf.mxu0
        %v1112 = vpop.f32.mrf.mxu0
        %v1113 = vadd.f32 %v937, %v1112
        %v1114 = vpop.f32.mrf.mxu0
        %1115 = vmatprep.mubr.bf16.mxu0 %v897
        %1116 = vmatmul.mubr.bf16.gmra.mxu0 %v896
        %v1117 = vpop.f32.mrf.mxu0
        %v1118 = vadd.f32 %v937, %v1117
        %v1119 = vpop.f32.mrf.mxu0
        %v1120 = vpop.f32.mrf.mxu0
        %v1121 = vadd.f32 %v937, %v1120
        %v1122 = vpop.f32.mrf.mxu0
        %1123 = vmatprep.mubr.bf16.mxu0 %v899
        %1124 = vmatmul.mubr.bf16.gmra.mxu0 %v898
        %v1125 = vpop.f32.mrf.mxu0
        %v1126 = vadd.f32 %v937, %v1125
        %v1127 = vpop.f32.mrf.mxu0
        %v1128 = vpop.f32.mrf.mxu0
        %v1129 = vadd.f32 %v937, %v1128
        %v1130 = vpop.f32.mrf.mxu0
        %1131 = vdwg.mxu0
        %v1132 = vmax.f32 %v1070, 0.0
        %v1133 = vmax.f32 %v1073, 0.0
        %v1134 = vmax.f32 %v1078, 0.0
        %v1135 = vmax.f32 %v1081, 0.0
        %v1136 = vmax.f32 %v1086, 0.0
        %v1137 = vmax.f32 %v1089, 0.0
        %v1138 = vmax.f32 %v1094, 0.0
        %v1139 = vmax.f32 %v1097, 0.0
        %v1140 = vmax.f32 %v1102, 0.0
        %v1141 = vmax.f32 %v1105, 0.0
        %v1142 = vmax.f32 %v1110, 0.0
        %v1143 = vmax.f32 %v1113, 0.0
        %v1144 = vmax.f32 %v1118, 0.0
        %v1145 = vmax.f32 %v1121, 0.0
        %v1146 = vmax.f32 %v1126, 0.0
        %v1147 = vmax.f32 %v1129, 0.0
        %v1148 = vpack.c.bf16 %v1133, %v1132
        %v1149 = vpack.c.bf16 %v1135, %v1134
        %v1150 = vpack.c.bf16 %v1137, %v1136
        %v1151 = vpack.c.bf16 %v1139, %v1138
        %v1152 = vpack.c.bf16 %v1141, %v1140
        %v1153 = vpack.c.bf16 %v1143, %v1142
        %v1154 = vpack.c.bf16 %v1145, %v1144
        %v1155 = vpack.c.bf16 %v1147, %v1146
        %v1156 = vld [vmem:[#allocation8] sm:$0xff]
        %v1157 = vld [vmem:[#allocation8 + $0x8] sm:$0xff]
        %v1158 = vld [vmem:[#allocation8 + $0x10] sm:$0xff]
        %v1159 = vld [vmem:[#allocation8 + $0x18] sm:$0xff]
        %v1160 = vld [vmem:[#allocation8 + $0x20] sm:$0xff]
        %v1161 = vld [vmem:[#allocation8 + $0x28] sm:$0xff]
        %v1162 = vld [vmem:[#allocation8 + $0x30] sm:$0xff]
        %v1163 = vld [vmem:[#allocation8 + $0x38] sm:$0xff]
        %v1164 = vld [vmem:[#allocation8 + $0x40] sm:$0xff]
        %v1165 = vld [vmem:[#allocation8 + $0x48] sm:$0xff]
        %v1166 = vld [vmem:[#allocation8 + $0x50] sm:$0xff]
        %v1167 = vld [vmem:[#allocation8 + $0x58] sm:$0xff]
        %v1168 = vld [vmem:[#allocation8 + $0x60] sm:$0xff]
        %v1169 = vld [vmem:[#allocation8 + $0x68] sm:$0xff]
        %v1170 = vld [vmem:[#allocation8 + $0x70] sm:$0xff]
        %v1171 = vld [vmem:[#allocation8 + $0x78] sm:$0xff]
        %v1188 = vunpack.c.l.b16 %v1156
        %v1189 = vunpack.c.h.b16 %v1156
        %v1190 = vunpack.c.l.b16 %v1157
        %v1191 = vunpack.c.h.b16 %v1157
        %v1192 = vunpack.c.l.b16 %v1158
        %v1193 = vunpack.c.h.b16 %v1158
        %v1194 = vunpack.c.l.b16 %v1159
        %v1195 = vunpack.c.h.b16 %v1159
        %v1196 = vunpack.c.l.b16 %v1160
        %v1197 = vunpack.c.h.b16 %v1160
        %v1198 = vunpack.c.l.b16 %v1161
        %v1199 = vunpack.c.h.b16 %v1161
        %v1200 = vunpack.c.l.b16 %v1162
        %v1201 = vunpack.c.h.b16 %v1162
        %v1202 = vunpack.c.l.b16 %v1163
        %v1203 = vunpack.c.h.b16 %v1163
        %v1204 = vunpack.c.l.b16 %v1164
        %v1205 = vunpack.c.h.b16 %v1164
        %v1206 = vunpack.c.l.b16 %v1165
        %v1207 = vunpack.c.h.b16 %v1165
        %v1208 = vunpack.c.l.b16 %v1166
        %v1209 = vunpack.c.h.b16 %v1166
        %v1210 = vunpack.c.l.b16 %v1167
        %v1211 = vunpack.c.h.b16 %v1167
        %v1212 = vunpack.c.l.b16 %v1168
        %v1213 = vunpack.c.h.b16 %v1168
        %v1214 = vunpack.c.l.b16 %v1169
        %v1215 = vunpack.c.h.b16 %v1169
        %v1216 = vunpack.c.l.b16 %v1170
        %v1217 = vunpack.c.h.b16 %v1170
        %v1218 = vunpack.c.l.b16 %v1171
        %v1219 = vunpack.c.h.b16 %v1171
        %v1220 = vpack.c.b16 %v1190, %v1188
        %v1221 = vpack.c.b16 %v1191, %v1189
        %v1222 = vpack.c.b16 %v1194, %v1192
        %v1223 = vpack.c.b16 %v1195, %v1193
        %v1224 = vpack.c.b16 %v1198, %v1196
        %v1225 = vpack.c.b16 %v1199, %v1197
        %v1226 = vpack.c.b16 %v1202, %v1200
        %v1227 = vpack.c.b16 %v1203, %v1201
        %v1228 = vpack.c.b16 %v1206, %v1204
        %v1229 = vpack.c.b16 %v1207, %v1205
        %v1230 = vpack.c.b16 %v1210, %v1208
        %v1231 = vpack.c.b16 %v1211, %v1209
        %v1232 = vpack.c.b16 %v1214, %v1212
        %v1233 = vpack.c.b16 %v1215, %v1213
        %v1234 = vpack.c.b16 %v1218, %v1216
        %v1235 = vpack.c.b16 %v1219, %v1217
        %1252 = vmatprep.subr.bf16.mxu0 %v1235
        %1253 = vmatpush1.bf16.msra.mxu0 %v1234
        %1254 = vmatprep.subr.bf16.mxu0 %v1233
        %1255 = vmatpush1.bf16.msra.mxu0 %v1232
        %1256 = vmatprep.subr.bf16.mxu0 %v1231
        %1257 = vmatpush1.bf16.msra.mxu0 %v1230
        %1258 = vmatprep.subr.bf16.mxu0 %v1229
        %1259 = vmatpush1.bf16.msra.mxu0 %v1228
        %1260 = vmatprep.subr.bf16.mxu0 %v1227
        %1261 = vmatpush1.bf16.msra.mxu0 %v1226
        %1262 = vmatprep.subr.bf16.mxu0 %v1225
        %1263 = vmatpush1.bf16.msra.mxu0 %v1224
        %1264 = vmatprep.subr.bf16.mxu0 %v1223
        %1265 = vmatpush1.bf16.msra.mxu0 %v1222
        %1266 = vmatprep.subr.bf16.mxu0 %v1221
        %1267 = vmatpush1.bf16.msra.mxu0 %v1220
        %1268 = vmatprep.subr.bf16.mxu0 0
        %1269 = vmatpush2.bf16.msra.mxu0 0
        %1270 = vmatprep.subr.bf16.mxu0 0
        %1271 = vmatpush2.bf16.msra.mxu0 0
        %1272 = vmatprep.subr.bf16.mxu0 0
        %1273 = vmatpush2.bf16.msra.mxu0 0
        %1274 = vmatprep.subr.bf16.mxu0 0
        %1275 = vmatpush2.bf16.msra.mxu0 0
        %1276 = vmatprep.subr.bf16.mxu0 0
        %1277 = vmatpush2.bf16.msra.mxu0 0
        %1278 = vmatprep.subr.bf16.mxu0 0
        %1279 = vmatpush2.bf16.msra.mxu0 0
        %1280 = vmatprep.subr.bf16.mxu0 0
        %1281 = vmatpush2.bf16.msra.mxu0 0
        %1282 = vmatprep.subr.bf16.mxu0 0
        %1283 = vmatpush2.bf16.msra.mxu0 0
        %1284 = vmatprep.mubr.bf16.mxu0 0
        %1285 = vmatmul.mubr.bf16.gmra.mxu0 %v1148
        %v1286 = vpop.f32.mrf.mxu0
        %v1287 = vadd.f32 0.0, %v1286
        %v1288 = vpop.f32.mrf.mxu0
        %v1289 = vadd.f32 0.0, %v1288
        %v1290 = vpop.f32.mrf.mxu0
        %v1291 = vadd.f32 0.0, %v1290
        %v1292 = vpop.f32.mrf.mxu0
        %v1293 = vadd.f32 0.0, %v1292
        %1294 = vmatprep.mubr.bf16.mxu0 0
        %1295 = vmatmul.mubr.bf16.gmra.mxu0 %v1149
        %v1296 = vpop.f32.mrf.mxu0
        %v1297 = vadd.f32 0.0, %v1296
        %v1298 = vpop.f32.mrf.mxu0
        %v1299 = vadd.f32 0.0, %v1298
        %v1300 = vpop.f32.mrf.mxu0
        %v1301 = vadd.f32 0.0, %v1300
        %v1302 = vpop.f32.mrf.mxu0
        %v1303 = vadd.f32 0.0, %v1302
        %1304 = vmatprep.mubr.bf16.mxu0 0
        %1305 = vmatmul.mubr.bf16.gmra.mxu0 %v1150
        %v1306 = vpop.f32.mrf.mxu0
        %v1307 = vadd.f32 0.0, %v1306
        %v1308 = vpop.f32.mrf.mxu0
        %v1309 = vadd.f32 0.0, %v1308
        %v1310 = vpop.f32.mrf.mxu0
        %v1311 = vadd.f32 0.0, %v1310
        %v1312 = vpop.f32.mrf.mxu0
        %v1313 = vadd.f32 0.0, %v1312
        %1314 = vmatprep.mubr.bf16.mxu0 0
        %1315 = vmatmul.mubr.bf16.gmra.mxu0 %v1151
        %v1316 = vpop.f32.mrf.mxu0
        %v1317 = vadd.f32 0.0, %v1316
        %v1318 = vpop.f32.mrf.mxu0
        %v1319 = vadd.f32 0.0, %v1318
        %v1320 = vpop.f32.mrf.mxu0
        %v1321 = vadd.f32 0.0, %v1320
        %v1322 = vpop.f32.mrf.mxu0
        %v1323 = vadd.f32 0.0, %v1322
        %1324 = vmatprep.mubr.bf16.mxu0 0
        %1325 = vmatmul.mubr.bf16.gmra.mxu0 %v1152
        %v1326 = vpop.f32.mrf.mxu0
        %v1327 = vadd.f32 0.0, %v1326
        %v1328 = vpop.f32.mrf.mxu0
        %v1329 = vadd.f32 0.0, %v1328
        %v1330 = vpop.f32.mrf.mxu0
        %v1331 = vadd.f32 0.0, %v1330
        %v1332 = vpop.f32.mrf.mxu0
        %v1333 = vadd.f32 0.0, %v1332
        %1334 = vmatprep.mubr.bf16.mxu0 0
        %1335 = vmatmul.mubr.bf16.gmra.mxu0 %v1153
        %v1336 = vpop.f32.mrf.mxu0
        %v1337 = vadd.f32 0.0, %v1336
        %v1338 = vpop.f32.mrf.mxu0
        %v1339 = vadd.f32 0.0, %v1338
        %v1340 = vpop.f32.mrf.mxu0
        %v1341 = vadd.f32 0.0, %v1340
        %v1342 = vpop.f32.mrf.mxu0
        %v1343 = vadd.f32 0.0, %v1342
        %1344 = vmatprep.mubr.bf16.mxu0 0
        %1345 = vmatmul.mubr.bf16.gmra.mxu0 %v1154
        %v1346 = vpop.f32.mrf.mxu0
        %v1347 = vadd.f32 0.0, %v1346
        %v1348 = vpop.f32.mrf.mxu0
        %v1349 = vadd.f32 0.0, %v1348
        %v1350 = vpop.f32.mrf.mxu0
        %v1351 = vadd.f32 0.0, %v1350
        %v1352 = vpop.f32.mrf.mxu0
        %v1353 = vadd.f32 0.0, %v1352
        %1354 = vmatprep.mubr.bf16.mxu0 0
        %1355 = vmatmul.mubr.bf16.gmra.mxu0 %v1155
        %v1356 = vpop.f32.mrf.mxu0
        %v1357 = vadd.f32 0.0, %v1356
        %v1358 = vpop.f32.mrf.mxu0
        %v1359 = vadd.f32 0.0, %v1358
        %v1360 = vpop.f32.mrf.mxu0
        %v1361 = vadd.f32 0.0, %v1360
        %v1362 = vpop.f32.mrf.mxu0
        %v1363 = vadd.f32 0.0, %v1362
        %1364 = vdwg.mxu0
        %v1365 = vadd.f32 %v852, %v1287
        %v1366 = vadd.f32 %v853, %v1289
        %v1367 = vadd.f32 %v854, %v1291
        %v1368 = vadd.f32 %v855, %v1293
        %v1369 = vadd.f32 %v856, %v1297
        %v1370 = vadd.f32 %v857, %v1299
        %v1371 = vadd.f32 %v858, %v1301
        %v1372 = vadd.f32 %v859, %v1303
        %v1373 = vadd.f32 %v860, %v1307
        %v1374 = vadd.f32 %v861, %v1309
        %v1375 = vadd.f32 %v862, %v1311
        %v1376 = vadd.f32 %v863, %v1313
        %v1377 = vadd.f32 %v864, %v1317
        %v1378 = vadd.f32 %v865, %v1319
        %v1379 = vadd.f32 %v866, %v1321
        %v1380 = vadd.f32 %v867, %v1323
        %v1381 = vadd.f32 %v868, %v1327
        %v1382 = vadd.f32 %v869, %v1329
        %v1383 = vadd.f32 %v870, %v1331
        %v1384 = vadd.f32 %v871, %v1333
        %v1385 = vadd.f32 %v872, %v1337
        %v1386 = vadd.f32 %v873, %v1339
        %v1387 = vadd.f32 %v874, %v1341
        %v1388 = vadd.f32 %v875, %v1343
        %v1389 = vadd.f32 %v876, %v1347
        %v1390 = vadd.f32 %v877, %v1349
        %v1391 = vadd.f32 %v878, %v1351
        %v1392 = vadd.f32 %v879, %v1353
        %v1393 = vadd.f32 %v880, %v1357
        %v1394 = vadd.f32 %v881, %v1359
        %v1395 = vadd.f32 %v882, %v1361
        %v1396 = vadd.f32 %v883, %v1363
        %v1397 = vld [vmem:[%s6] sm:$0x3]
        %v1399 = vlaneseq
        %v1400 = vshrl.u32 %v1399, 7
        %v1401 = vsub.s32 0, %v1400
        %v1402 = vrot.slane %v1397, %v1401
        %v1403 = vlaneseq
        %v1404 = vshrl.u32 %v1403, 7
        %v1405 = vsub.s32 1, %v1404
        %v1406 = vrot.slane %v1397, %v1405
        %v1409 = vadd.f32 %v1365, %v1402
        %v1410 = vadd.f32 %v1366, %v1406
        %v1411 = vadd.f32 %v1367, %v1402
        %v1412 = vadd.f32 %v1368, %v1406
        %v1413 = vadd.f32 %v1369, %v1402
        %v1414 = vadd.f32 %v1370, %v1406
        %v1415 = vadd.f32 %v1371, %v1402
        %v1416 = vadd.f32 %v1372, %v1406
        %v1417 = vadd.f32 %v1373, %v1402
        %v1418 = vadd.f32 %v1374, %v1406
        %v1419 = vadd.f32 %v1375, %v1402
        %v1420 = vadd.f32 %v1376, %v1406
        %v1421 = vadd.f32 %v1377, %v1402
        %v1422 = vadd.f32 %v1378, %v1406
        %v1423 = vadd.f32 %v1379, %v1402
        %v1424 = vadd.f32 %v1380, %v1406
        %v1425 = vadd.f32 %v1381, %v1402
        %v1426 = vadd.f32 %v1382, %v1406
        %v1427 = vadd.f32 %v1383, %v1402
        %v1428 = vadd.f32 %v1384, %v1406
        %v1429 = vadd.f32 %v1385, %v1402
        %v1430 = vadd.f32 %v1386, %v1406
        %v1431 = vadd.f32 %v1387, %v1402
        %v1432 = vadd.f32 %v1388, %v1406
        %v1433 = vadd.f32 %v1389, %v1402
        %v1434 = vadd.f32 %v1390, %v1406
        %v1435 = vadd.f32 %v1391, %v1402
        %v1436 = vadd.f32 %v1392, %v1406
        %v1437 = vadd.f32 %v1393, %v1402
        %v1438 = vadd.f32 %v1394, %v1406
        %v1439 = vadd.f32 %v1395, %v1402
        %v1440 = vadd.f32 %v1396, %v1406
        %v1441 = vmul.f32 %v1409, 0.01
        %v1442 = vmul.f32 %v1410, 0.01
        %v1443 = vmul.f32 %v1411, 0.01
        %v1444 = vmul.f32 %v1412, 0.01
        %v1445 = vmul.f32 %v1413, 0.01
        %v1446 = vmul.f32 %v1414, 0.01
        %v1447 = vmul.f32 %v1415, 0.01
        %v1448 = vmul.f32 %v1416, 0.01
        %v1449 = vmul.f32 %v1417, 0.01
        %v1450 = vmul.f32 %v1418, 0.01
        %v1451 = vmul.f32 %v1419, 0.01
        %v1452 = vmul.f32 %v1420, 0.01
        %v1453 = vmul.f32 %v1421, 0.01
        %v1454 = vmul.f32 %v1422, 0.01
        %v1455 = vmul.f32 %v1423, 0.01
        %v1456 = vmul.f32 %v1424, 0.01
        %v1457 = vmul.f32 %v1425, 0.01
        %v1458 = vmul.f32 %v1426, 0.01
        %v1459 = vmul.f32 %v1427, 0.01
        %v1460 = vmul.f32 %v1428, 0.01
        %v1461 = vmul.f32 %v1429, 0.01
        %v1462 = vmul.f32 %v1430, 0.01
        %v1463 = vmul.f32 %v1431, 0.01
        %v1464 = vmul.f32 %v1432, 0.01
        %v1465 = vmul.f32 %v1433, 0.01
        %v1466 = vmul.f32 %v1434, 0.01
        %v1467 = vmul.f32 %v1435, 0.01
        %v1468 = vmul.f32 %v1436, 0.01
        %v1469 = vmul.f32 %v1437, 0.01
        %v1470 = vmul.f32 %v1438, 0.01
        %v1471 = vmul.f32 %v1439, 0.01
        %v1472 = vmul.f32 %v1440, 0.01
        %v1473 = vmax.f32 %v1409, %v1441
        %v1474 = vmax.f32 %v1410, %v1442
        %v1475 = vmax.f32 %v1411, %v1443
        %v1476 = vmax.f32 %v1412, %v1444
        %v1477 = vmax.f32 %v1413, %v1445
        %v1478 = vmax.f32 %v1414, %v1446
        %v1479 = vmax.f32 %v1415, %v1447
        %v1480 = vmax.f32 %v1416, %v1448
        %v1481 = vmax.f32 %v1417, %v1449
        %v1482 = vmax.f32 %v1418, %v1450
        %v1483 = vmax.f32 %v1419, %v1451
        %v1484 = vmax.f32 %v1420, %v1452
        %v1485 = vmax.f32 %v1421, %v1453
        %v1486 = vmax.f32 %v1422, %v1454
        %v1487 = vmax.f32 %v1423, %v1455
        %v1488 = vmax.f32 %v1424, %v1456
        %v1489 = vmax.f32 %v1425, %v1457
        %v1490 = vmax.f32 %v1426, %v1458
        %v1491 = vmax.f32 %v1427, %v1459
        %v1492 = vmax.f32 %v1428, %v1460
        %v1493 = vmax.f32 %v1429, %v1461
        %v1494 = vmax.f32 %v1430, %v1462
        %v1495 = vmax.f32 %v1431, %v1463
        %v1496 = vmax.f32 %v1432, %v1464
        %v1497 = vmax.f32 %v1433, %v1465
        %v1498 = vmax.f32 %v1434, %v1466
        %v1499 = vmax.f32 %v1435, %v1467
        %v1500 = vmax.f32 %v1436, %v1468
        %v1501 = vmax.f32 %v1437, %v1469
        %v1502 = vmax.f32 %v1438, %v1470
        %v1503 = vmax.f32 %v1439, %v1471
        %v1504 = vmax.f32 %v1440, %v1472
        %v1505 = vpack.c.bf16 %v1475, %v1473
        %v1506 = vpack.c.bf16 %v1476, %v1474
        %v1507 = vpack.c.bf16 %v1479, %v1477
        %v1508 = vpack.c.bf16 %v1480, %v1478
        %v1509 = vpack.c.bf16 %v1483, %v1481
        %v1510 = vpack.c.bf16 %v1484, %v1482
        %v1511 = vpack.c.bf16 %v1487, %v1485
        %v1512 = vpack.c.bf16 %v1488, %v1486
        %v1513 = vpack.c.bf16 %v1491, %v1489
        %v1514 = vpack.c.bf16 %v1492, %v1490
        %v1515 = vpack.c.bf16 %v1495, %v1493
        %v1516 = vpack.c.bf16 %v1496, %v1494
        %v1517 = vpack.c.bf16 %v1499, %v1497
        %v1518 = vpack.c.bf16 %v1500, %v1498
        %v1519 = vpack.c.bf16 %v1503, %v1501
        %v1520 = vpack.c.bf16 %v1504, %v1502
        %v1521 = vld [vmem:[#allocation10] sm:$0xf]
        %v1522 = vld [vmem:[#allocation10 + $0x4] sm:$0xf]
        %v1523 = vld [vmem:[#allocation10 + $0x8] sm:$0xf]
        %v1524 = vld [vmem:[#allocation10 + $0xc] sm:$0xf]
        %v1525 = vld [vmem:[#allocation10 + $0x10] sm:$0xf]
        %v1526 = vld [vmem:[#allocation10 + $0x14] sm:$0xf]
        %v1527 = vld [vmem:[#allocation10 + $0x18] sm:$0xf]
        %v1528 = vld [vmem:[#allocation10 + $0x1c] sm:$0xf]
        %v1529 = vld [vmem:[#allocation10 + $0x20] sm:$0xf]
        %v1530 = vld [vmem:[#allocation10 + $0x24] sm:$0xf]
        %v1531 = vld [vmem:[#allocation10 + $0x28] sm:$0xf]
        %v1532 = vld [vmem:[#allocation10 + $0x2c] sm:$0xf]
        %v1533 = vld [vmem:[#allocation10 + $0x30] sm:$0xf]
        %v1534 = vld [vmem:[#allocation10 + $0x34] sm:$0xf]
        %v1535 = vld [vmem:[#allocation10 + $0x38] sm:$0xf]
        %v1536 = vld [vmem:[#allocation10 + $0x3c] sm:$0xf]
        %v1537 = vld [vmem:[#allocation10 + $0x40] sm:$0xf]
        %v1538 = vld [vmem:[#allocation10 + $0x44] sm:$0xf]
        %v1539 = vld [vmem:[#allocation10 + $0x48] sm:$0xf]
        %v1540 = vld [vmem:[#allocation10 + $0x4c] sm:$0xf]
        %v1541 = vld [vmem:[#allocation10 + $0x50] sm:$0xf]
        %v1542 = vld [vmem:[#allocation10 + $0x54] sm:$0xf]
        %v1543 = vld [vmem:[#allocation10 + $0x58] sm:$0xf]
        %v1544 = vld [vmem:[#allocation10 + $0x5c] sm:$0xf]
        %v1545 = vld [vmem:[#allocation10 + $0x60] sm:$0xf]
        %v1546 = vld [vmem:[#allocation10 + $0x64] sm:$0xf]
        %v1547 = vld [vmem:[#allocation10 + $0x68] sm:$0xf]
        %v1548 = vld [vmem:[#allocation10 + $0x6c] sm:$0xf]
        %v1549 = vld [vmem:[#allocation10 + $0x70] sm:$0xf]
        %v1550 = vld [vmem:[#allocation10 + $0x74] sm:$0xf]
        %v1551 = vld [vmem:[#allocation10 + $0x78] sm:$0xf]
        %v1552 = vld [vmem:[#allocation10 + $0x7c] sm:$0xf]
        %v1553 = vld [vmem:[%s8] sm:$0x1]
        %v1555 = vlaneseq
        %v1556 = vshrl.u32 %v1555, 7
        %v1557 = vsub.s32 0, %v1556
        %v1558 = vrot.slane %v1553, %v1557
        %v1592 = vunpack.c.l.b16 %v1521
        %v1593 = vunpack.c.l.b16 %v1522
        %v1594 = vunpack.c.l.b16 %v1523
        %v1595 = vunpack.c.l.b16 %v1524
        %v1596 = vunpack.c.l.b16 %v1525
        %v1597 = vunpack.c.l.b16 %v1526
        %v1598 = vunpack.c.l.b16 %v1527
        %v1599 = vunpack.c.l.b16 %v1528
        %v1600 = vunpack.c.l.b16 %v1529
        %v1601 = vunpack.c.l.b16 %v1530
        %v1602 = vunpack.c.l.b16 %v1531
        %v1603 = vunpack.c.l.b16 %v1532
        %v1604 = vunpack.c.l.b16 %v1533
        %v1605 = vunpack.c.l.b16 %v1534
        %v1606 = vunpack.c.l.b16 %v1535
        %v1607 = vunpack.c.l.b16 %v1536
        %v1608 = vunpack.c.l.b16 %v1537
        %v1609 = vunpack.c.l.b16 %v1538
        %v1610 = vunpack.c.l.b16 %v1539
        %v1611 = vunpack.c.l.b16 %v1540
        %v1612 = vunpack.c.l.b16 %v1541
        %v1613 = vunpack.c.l.b16 %v1542
        %v1614 = vunpack.c.l.b16 %v1543
        %v1615 = vunpack.c.l.b16 %v1544
        %v1616 = vunpack.c.l.b16 %v1545
        %v1617 = vunpack.c.l.b16 %v1546
        %v1618 = vunpack.c.l.b16 %v1547
        %v1619 = vunpack.c.l.b16 %v1548
        %v1620 = vunpack.c.l.b16 %v1549
        %v1621 = vunpack.c.l.b16 %v1550
        %v1622 = vunpack.c.l.b16 %v1551
        %v1623 = vunpack.c.l.b16 %v1552
        %v1624 = vpack.c.b16 %v1593, %v1592
        %v1625 = vpack.c.b16 %v1595, %v1594
        %v1626 = vpack.c.b16 %v1597, %v1596
        %v1627 = vpack.c.b16 %v1599, %v1598
        %v1628 = vpack.c.b16 %v1601, %v1600
        %v1629 = vpack.c.b16 %v1603, %v1602
        %v1630 = vpack.c.b16 %v1605, %v1604
        %v1631 = vpack.c.b16 %v1607, %v1606
        %v1632 = vpack.c.b16 %v1609, %v1608
        %v1633 = vpack.c.b16 %v1611, %v1610
        %v1634 = vpack.c.b16 %v1613, %v1612
        %v1635 = vpack.c.b16 %v1615, %v1614
        %v1636 = vpack.c.b16 %v1617, %v1616
        %v1637 = vpack.c.b16 %v1619, %v1618
        %v1638 = vpack.c.b16 %v1621, %v1620
        %v1639 = vpack.c.b16 %v1623, %v1622
        %1656 = vmatprep.subr.bf16.mxu0 0
        %1657 = vmatpush1.bf16.msra.mxu0 %v1631
        %1658 = vmatprep.subr.bf16.mxu0 0
        %1659 = vmatpush1.bf16.msra.mxu0 %v1630
        %1660 = vmatprep.subr.bf16.mxu0 0
        %1661 = vmatpush1.bf16.msra.mxu0 %v1629
        %1662 = vmatprep.subr.bf16.mxu0 0
        %1663 = vmatpush1.bf16.msra.mxu0 %v1628
        %1664 = vmatprep.subr.bf16.mxu0 0
        %1665 = vmatpush1.bf16.msra.mxu0 %v1627
        %1666 = vmatprep.subr.bf16.mxu0 0
        %1667 = vmatpush1.bf16.msra.mxu0 %v1626
        %1668 = vmatprep.subr.bf16.mxu0 0
        %1669 = vmatpush1.bf16.msra.mxu0 %v1625
        %1670 = vmatprep.subr.bf16.mxu0 0
        %1671 = vmatpush1.bf16.msra.mxu0 %v1624
        %1672 = vmatprep.subr.bf16.mxu0 0
        %1673 = vmatpush2.bf16.msra.mxu0 %v1639
        %1674 = vmatprep.subr.bf16.mxu0 0
        %1675 = vmatpush2.bf16.msra.mxu0 %v1638
        %1676 = vmatprep.subr.bf16.mxu0 0
        %1677 = vmatpush2.bf16.msra.mxu0 %v1637
        %1678 = vmatprep.subr.bf16.mxu0 0
        %1679 = vmatpush2.bf16.msra.mxu0 %v1636
        %1680 = vmatprep.subr.bf16.mxu0 0
        %1681 = vmatpush2.bf16.msra.mxu0 %v1635
        %1682 = vmatprep.subr.bf16.mxu0 0
        %1683 = vmatpush2.bf16.msra.mxu0 %v1634
        %1684 = vmatprep.subr.bf16.mxu0 0
        %1685 = vmatpush2.bf16.msra.mxu0 %v1633
        %1686 = vmatprep.subr.bf16.mxu0 0
        %1687 = vmatpush2.bf16.msra.mxu0 %v1632
        %1688 = vmatprep.mubr.bf16.mxu0 %v1506
        %1689 = vmatmul.mubr.bf16.gmra.mxu0 %v1505
        %v1690 = vpop.f32.mrf.mxu0
        %v1691 = vadd.f32 %v1558, %v1690
        %v1692 = vpop.f32.mrf.mxu0
        %v1693 = vpop.f32.mrf.mxu0
        %v1694 = vadd.f32 %v1558, %v1693
        %v1695 = vpop.f32.mrf.mxu0
        %1696 = vmatprep.mubr.bf16.mxu0 %v1508
        %1697 = vmatmul.mubr.bf16.gmra.mxu0 %v1507
        %v1698 = vpop.f32.mrf.mxu0
        %v1699 = vadd.f32 %v1558, %v1698
        %v1700 = vpop.f32.mrf.mxu0
        %v1701 = vpop.f32.mrf.mxu0
        %v1702 = vadd.f32 %v1558, %v1701
        %v1703 = vpop.f32.mrf.mxu0
        %1704 = vmatprep.mubr.bf16.mxu0 %v1510
        %1705 = vmatmul.mubr.bf16.gmra.mxu0 %v1509
        %v1706 = vpop.f32.mrf.mxu0
        %v1707 = vadd.f32 %v1558, %v1706
        %v1708 = vpop.f32.mrf.mxu0
        %v1709 = vpop.f32.mrf.mxu0
        %v1710 = vadd.f32 %v1558, %v1709
        %v1711 = vpop.f32.mrf.mxu0
        %1712 = vmatprep.mubr.bf16.mxu0 %v1512
        %1713 = vmatmul.mubr.bf16.gmra.mxu0 %v1511
        %v1714 = vpop.f32.mrf.mxu0
        %v1715 = vadd.f32 %v1558, %v1714
        %v1716 = vpop.f32.mrf.mxu0
        %v1717 = vpop.f32.mrf.mxu0
        %v1718 = vadd.f32 %v1558, %v1717
        %v1719 = vpop.f32.mrf.mxu0
        %1720 = vmatprep.mubr.bf16.mxu0 %v1514
        %1721 = vmatmul.mubr.bf16.gmra.mxu0 %v1513
        %v1722 = vpop.f32.mrf.mxu0
        %v1723 = vadd.f32 %v1558, %v1722
        %v1724 = vpop.f32.mrf.mxu0
        %v1725 = vpop.f32.mrf.mxu0
        %v1726 = vadd.f32 %v1558, %v1725
        %v1727 = vpop.f32.mrf.mxu0
        %1728 = vmatprep.mubr.bf16.mxu0 %v1516
        %1729 = vmatmul.mubr.bf16.gmra.mxu0 %v1515
        %v1730 = vpop.f32.mrf.mxu0
        %v1731 = vadd.f32 %v1558, %v1730
        %v1732 = vpop.f32.mrf.mxu0
        %v1733 = vpop.f32.mrf.mxu0
        %v1734 = vadd.f32 %v1558, %v1733
        %v1735 = vpop.f32.mrf.mxu0
        %1736 = vmatprep.mubr.bf16.mxu0 %v1518
        %1737 = vmatmul.mubr.bf16.gmra.mxu0 %v1517
        %v1738 = vpop.f32.mrf.mxu0
        %v1739 = vadd.f32 %v1558, %v1738
        %v1740 = vpop.f32.mrf.mxu0
        %v1741 = vpop.f32.mrf.mxu0
        %v1742 = vadd.f32 %v1558, %v1741
        %v1743 = vpop.f32.mrf.mxu0
        %1744 = vmatprep.mubr.bf16.mxu0 %v1520
        %1745 = vmatmul.mubr.bf16.gmra.mxu0 %v1519
        %v1746 = vpop.f32.mrf.mxu0
        %v1747 = vadd.f32 %v1558, %v1746
        %v1748 = vpop.f32.mrf.mxu0
        %v1749 = vpop.f32.mrf.mxu0
        %v1750 = vadd.f32 %v1558, %v1749
        %v1751 = vpop.f32.mrf.mxu0
        %1752 = vdwg.mxu0
        %v1753 = vmax.f32 %v1691, 0.0
        %v1754 = vmax.f32 %v1694, 0.0
        %v1755 = vmax.f32 %v1699, 0.0
        %v1756 = vmax.f32 %v1702, 0.0
        %v1757 = vmax.f32 %v1707, 0.0
        %v1758 = vmax.f32 %v1710, 0.0
        %v1759 = vmax.f32 %v1715, 0.0
        %v1760 = vmax.f32 %v1718, 0.0
        %v1761 = vmax.f32 %v1723, 0.0
        %v1762 = vmax.f32 %v1726, 0.0
        %v1763 = vmax.f32 %v1731, 0.0
        %v1764 = vmax.f32 %v1734, 0.0
        %v1765 = vmax.f32 %v1739, 0.0
        %v1766 = vmax.f32 %v1742, 0.0
        %v1767 = vmax.f32 %v1747, 0.0
        %v1768 = vmax.f32 %v1750, 0.0
        %v1769 = vpack.c.bf16 %v1754, %v1753
        %v1770 = vpack.c.bf16 %v1756, %v1755
        %v1771 = vpack.c.bf16 %v1758, %v1757
        %v1772 = vpack.c.bf16 %v1760, %v1759
        %v1773 = vpack.c.bf16 %v1762, %v1761
        %v1774 = vpack.c.bf16 %v1764, %v1763
        %v1775 = vpack.c.bf16 %v1766, %v1765
        %v1776 = vpack.c.bf16 %v1768, %v1767
        %v1777 = vld [vmem:[#allocation11] sm:$0xff]
        %v1778 = vld [vmem:[#allocation11 + $0x8] sm:$0xff]
        %v1779 = vld [vmem:[#allocation11 + $0x10] sm:$0xff]
        %v1780 = vld [vmem:[#allocation11 + $0x18] sm:$0xff]
        %v1781 = vld [vmem:[#allocation11 + $0x20] sm:$0xff]
        %v1782 = vld [vmem:[#allocation11 + $0x28] sm:$0xff]
        %v1783 = vld [vmem:[#allocation11 + $0x30] sm:$0xff]
        %v1784 = vld [vmem:[#allocation11 + $0x38] sm:$0xff]
        %v1785 = vld [vmem:[#allocation11 + $0x40] sm:$0xff]
        %v1786 = vld [vmem:[#allocation11 + $0x48] sm:$0xff]
        %v1787 = vld [vmem:[#allocation11 + $0x50] sm:$0xff]
        %v1788 = vld [vmem:[#allocation11 + $0x58] sm:$0xff]
        %v1789 = vld [vmem:[#allocation11 + $0x60] sm:$0xff]
        %v1790 = vld [vmem:[#allocation11 + $0x68] sm:$0xff]
        %v1791 = vld [vmem:[#allocation11 + $0x70] sm:$0xff]
        %v1792 = vld [vmem:[#allocation11 + $0x78] sm:$0xff]
        %v1809 = vunpack.c.l.b16 %v1777
        %v1810 = vunpack.c.h.b16 %v1777
        %v1811 = vunpack.c.l.b16 %v1778
        %v1812 = vunpack.c.h.b16 %v1778
        %v1813 = vunpack.c.l.b16 %v1779
        %v1814 = vunpack.c.h.b16 %v1779
        %v1815 = vunpack.c.l.b16 %v1780
        %v1816 = vunpack.c.h.b16 %v1780
        %v1817 = vunpack.c.l.b16 %v1781
        %v1818 = vunpack.c.h.b16 %v1781
        %v1819 = vunpack.c.l.b16 %v1782
        %v1820 = vunpack.c.h.b16 %v1782
        %v1821 = vunpack.c.l.b16 %v1783
        %v1822 = vunpack.c.h.b16 %v1783
        %v1823 = vunpack.c.l.b16 %v1784
        %v1824 = vunpack.c.h.b16 %v1784
        %v1825 = vunpack.c.l.b16 %v1785
        %v1826 = vunpack.c.h.b16 %v1785
        %v1827 = vunpack.c.l.b16 %v1786
        %v1828 = vunpack.c.h.b16 %v1786
        %v1829 = vunpack.c.l.b16 %v1787
        %v1830 = vunpack.c.h.b16 %v1787
        %v1831 = vunpack.c.l.b16 %v1788
        %v1832 = vunpack.c.h.b16 %v1788
        %v1833 = vunpack.c.l.b16 %v1789
        %v1834 = vunpack.c.h.b16 %v1789
        %v1835 = vunpack.c.l.b16 %v1790
        %v1836 = vunpack.c.h.b16 %v1790
        %v1837 = vunpack.c.l.b16 %v1791
        %v1838 = vunpack.c.h.b16 %v1791
        %v1839 = vunpack.c.l.b16 %v1792
        %v1840 = vunpack.c.h.b16 %v1792
        %v1841 = vpack.c.b16 %v1811, %v1809
        %v1842 = vpack.c.b16 %v1812, %v1810
        %v1843 = vpack.c.b16 %v1815, %v1813
        %v1844 = vpack.c.b16 %v1816, %v1814
        %v1845 = vpack.c.b16 %v1819, %v1817
        %v1846 = vpack.c.b16 %v1820, %v1818
        %v1847 = vpack.c.b16 %v1823, %v1821
        %v1848 = vpack.c.b16 %v1824, %v1822
        %v1849 = vpack.c.b16 %v1827, %v1825
        %v1850 = vpack.c.b16 %v1828, %v1826
        %v1851 = vpack.c.b16 %v1831, %v1829
        %v1852 = vpack.c.b16 %v1832, %v1830
        %v1853 = vpack.c.b16 %v1835, %v1833
        %v1854 = vpack.c.b16 %v1836, %v1834
        %v1855 = vpack.c.b16 %v1839, %v1837
        %v1856 = vpack.c.b16 %v1840, %v1838
        %1873 = vmatprep.subr.bf16.mxu0 %v1856
        %1874 = vmatpush1.bf16.msra.mxu0 %v1855
        %1875 = vmatprep.subr.bf16.mxu0 %v1854
        %1876 = vmatpush1.bf16.msra.mxu0 %v1853
        %1877 = vmatprep.subr.bf16.mxu0 %v1852
        %1878 = vmatpush1.bf16.msra.mxu0 %v1851
        %1879 = vmatprep.subr.bf16.mxu0 %v1850
        %1880 = vmatpush1.bf16.msra.mxu0 %v1849
        %1881 = vmatprep.subr.bf16.mxu0 %v1848
        %1882 = vmatpush1.bf16.msra.mxu0 %v1847
        %1883 = vmatprep.subr.bf16.mxu0 %v1846
        %1884 = vmatpush1.bf16.msra.mxu0 %v1845
        %1885 = vmatprep.subr.bf16.mxu0 %v1844
        %1886 = vmatpush1.bf16.msra.mxu0 %v1843
        %1887 = vmatprep.subr.bf16.mxu0 %v1842
        %1888 = vmatpush1.bf16.msra.mxu0 %v1841
        %1889 = vmatprep.subr.bf16.mxu0 0
        %1890 = vmatpush2.bf16.msra.mxu0 0
        %1891 = vmatprep.subr.bf16.mxu0 0
        %1892 = vmatpush2.bf16.msra.mxu0 0
        %1893 = vmatprep.subr.bf16.mxu0 0
        %1894 = vmatpush2.bf16.msra.mxu0 0
        %1895 = vmatprep.subr.bf16.mxu0 0
        %1896 = vmatpush2.bf16.msra.mxu0 0
        %1897 = vmatprep.subr.bf16.mxu0 0
        %1898 = vmatpush2.bf16.msra.mxu0 0
        %1899 = vmatprep.subr.bf16.mxu0 0
        %1900 = vmatpush2.bf16.msra.mxu0 0
        %1901 = vmatprep.subr.bf16.mxu0 0
        %1902 = vmatpush2.bf16.msra.mxu0 0
        %1903 = vmatprep.subr.bf16.mxu0 0
        %1904 = vmatpush2.bf16.msra.mxu0 0
        %1905 = vmatprep.mubr.bf16.mxu0 0
        %1906 = vmatmul.mubr.bf16.gmra.mxu0 %v1769
        %v1907 = vpop.f32.mrf.mxu0
        %v1908 = vadd.f32 0.0, %v1907
        %v1909 = vpop.f32.mrf.mxu0
        %v1910 = vadd.f32 0.0, %v1909
        %v1911 = vpop.f32.mrf.mxu0
        %v1912 = vadd.f32 0.0, %v1911
        %v1913 = vpop.f32.mrf.mxu0
        %v1914 = vadd.f32 0.0, %v1913
        %1915 = vmatprep.mubr.bf16.mxu0 0
        %1916 = vmatmul.mubr.bf16.gmra.mxu0 %v1770
        %v1917 = vpop.f32.mrf.mxu0
        %v1918 = vadd.f32 0.0, %v1917
        %v1919 = vpop.f32.mrf.mxu0
        %v1920 = vadd.f32 0.0, %v1919
        %v1921 = vpop.f32.mrf.mxu0
        %v1922 = vadd.f32 0.0, %v1921
        %v1923 = vpop.f32.mrf.mxu0
        %v1924 = vadd.f32 0.0, %v1923
        %1925 = vmatprep.mubr.bf16.mxu0 0
        %1926 = vmatmul.mubr.bf16.gmra.mxu0 %v1771
        %v1927 = vpop.f32.mrf.mxu0
        %v1928 = vadd.f32 0.0, %v1927
        %v1929 = vpop.f32.mrf.mxu0
        %v1930 = vadd.f32 0.0, %v1929
        %v1931 = vpop.f32.mrf.mxu0
        %v1932 = vadd.f32 0.0, %v1931
        %v1933 = vpop.f32.mrf.mxu0
        %v1934 = vadd.f32 0.0, %v1933
        %1935 = vmatprep.mubr.bf16.mxu0 0
        %1936 = vmatmul.mubr.bf16.gmra.mxu0 %v1772
        %v1937 = vpop.f32.mrf.mxu0
        %v1938 = vadd.f32 0.0, %v1937
        %v1939 = vpop.f32.mrf.mxu0
        %v1940 = vadd.f32 0.0, %v1939
        %v1941 = vpop.f32.mrf.mxu0
        %v1942 = vadd.f32 0.0, %v1941
        %v1943 = vpop.f32.mrf.mxu0
        %v1944 = vadd.f32 0.0, %v1943
        %1945 = vmatprep.mubr.bf16.mxu0 0
        %1946 = vmatmul.mubr.bf16.gmra.mxu0 %v1773
        %v1947 = vpop.f32.mrf.mxu0
        %v1948 = vadd.f32 0.0, %v1947
        %v1949 = vpop.f32.mrf.mxu0
        %v1950 = vadd.f32 0.0, %v1949
        %v1951 = vpop.f32.mrf.mxu0
        %v1952 = vadd.f32 0.0, %v1951
        %v1953 = vpop.f32.mrf.mxu0
        %v1954 = vadd.f32 0.0, %v1953
        %1955 = vmatprep.mubr.bf16.mxu0 0
        %1956 = vmatmul.mubr.bf16.gmra.mxu0 %v1774
        %v1957 = vpop.f32.mrf.mxu0
        %v1958 = vadd.f32 0.0, %v1957
        %v1959 = vpop.f32.mrf.mxu0
        %v1960 = vadd.f32 0.0, %v1959
        %v1961 = vpop.f32.mrf.mxu0
        %v1962 = vadd.f32 0.0, %v1961
        %v1963 = vpop.f32.mrf.mxu0
        %v1964 = vadd.f32 0.0, %v1963
        %1965 = vmatprep.mubr.bf16.mxu0 0
        %1966 = vmatmul.mubr.bf16.gmra.mxu0 %v1775
        %v1967 = vpop.f32.mrf.mxu0
        %v1968 = vadd.f32 0.0, %v1967
        %v1969 = vpop.f32.mrf.mxu0
        %v1970 = vadd.f32 0.0, %v1969
        %v1971 = vpop.f32.mrf.mxu0
        %v1972 = vadd.f32 0.0, %v1971
        %v1973 = vpop.f32.mrf.mxu0
        %v1974 = vadd.f32 0.0, %v1973
        %1975 = vmatprep.mubr.bf16.mxu0 0
        %1976 = vmatmul.mubr.bf16.gmra.mxu0 %v1776
        %v1977 = vpop.f32.mrf.mxu0
        %v1978 = vadd.f32 0.0, %v1977
        %v1979 = vpop.f32.mrf.mxu0
        %v1980 = vadd.f32 0.0, %v1979
        %v1981 = vpop.f32.mrf.mxu0
        %v1982 = vadd.f32 0.0, %v1981
        %v1983 = vpop.f32.mrf.mxu0
        %v1984 = vadd.f32 0.0, %v1983
        %1985 = vdwg.mxu0
        %v1986 = vadd.f32 %v1473, %v1908
        %v1987 = vadd.f32 %v1474, %v1910
        %v1988 = vadd.f32 %v1475, %v1912
        %v1989 = vadd.f32 %v1476, %v1914
        %v1990 = vadd.f32 %v1477, %v1918
        %v1991 = vadd.f32 %v1478, %v1920
        %v1992 = vadd.f32 %v1479, %v1922
        %v1993 = vadd.f32 %v1480, %v1924
        %v1994 = vadd.f32 %v1481, %v1928
        %v1995 = vadd.f32 %v1482, %v1930
        %v1996 = vadd.f32 %v1483, %v1932
        %v1997 = vadd.f32 %v1484, %v1934
        %v1998 = vadd.f32 %v1485, %v1938
        %v1999 = vadd.f32 %v1486, %v1940
        %v2000 = vadd.f32 %v1487, %v1942
        %v2001 = vadd.f32 %v1488, %v1944
        %v2002 = vadd.f32 %v1489, %v1948
        %v2003 = vadd.f32 %v1490, %v1950
        %v2004 = vadd.f32 %v1491, %v1952
        %v2005 = vadd.f32 %v1492, %v1954
        %v2006 = vadd.f32 %v1493, %v1958
        %v2007 = vadd.f32 %v1494, %v1960
        %v2008 = vadd.f32 %v1495, %v1962
        %v2009 = vadd.f32 %v1496, %v1964
        %v2010 = vadd.f32 %v1497, %v1968
        %v2011 = vadd.f32 %v1498, %v1970
        %v2012 = vadd.f32 %v1499, %v1972
        %v2013 = vadd.f32 %v1500, %v1974
        %v2014 = vadd.f32 %v1501, %v1978
        %v2015 = vadd.f32 %v1502, %v1980
        %v2016 = vadd.f32 %v1503, %v1982
        %v2017 = vadd.f32 %v1504, %v1984
        %v2018 = vld [vmem:[%s10] sm:$0x3]
        %v2020 = vlaneseq
        %v2021 = vshrl.u32 %v2020, 7
        %v2022 = vsub.s32 0, %v2021
        %v2023 = vrot.slane %v2018, %v2022
        %v2024 = vlaneseq
        %v2025 = vshrl.u32 %v2024, 7
        %v2026 = vsub.s32 1, %v2025
        %v2027 = vrot.slane %v2018, %v2026
        %v2030 = vadd.f32 %v1986, %v2023
        %v2031 = vadd.f32 %v1987, %v2027
        %v2032 = vadd.f32 %v1988, %v2023
        %v2033 = vadd.f32 %v1989, %v2027
        %v2034 = vadd.f32 %v1990, %v2023
        %v2035 = vadd.f32 %v1991, %v2027
        %v2036 = vadd.f32 %v1992, %v2023
        %v2037 = vadd.f32 %v1993, %v2027
        %v2038 = vadd.f32 %v1994, %v2023
        %v2039 = vadd.f32 %v1995, %v2027
        %v2040 = vadd.f32 %v1996, %v2023
        %v2041 = vadd.f32 %v1997, %v2027
        %v2042 = vadd.f32 %v1998, %v2023
        %v2043 = vadd.f32 %v1999, %v2027
        %v2044 = vadd.f32 %v2000, %v2023
        %v2045 = vadd.f32 %v2001, %v2027
        %v2046 = vadd.f32 %v2002, %v2023
        %v2047 = vadd.f32 %v2003, %v2027
        %v2048 = vadd.f32 %v2004, %v2023
        %v2049 = vadd.f32 %v2005, %v2027
        %v2050 = vadd.f32 %v2006, %v2023
        %v2051 = vadd.f32 %v2007, %v2027
        %v2052 = vadd.f32 %v2008, %v2023
        %v2053 = vadd.f32 %v2009, %v2027
        %v2054 = vadd.f32 %v2010, %v2023
        %v2055 = vadd.f32 %v2011, %v2027
        %v2056 = vadd.f32 %v2012, %v2023
        %v2057 = vadd.f32 %v2013, %v2027
        %v2058 = vadd.f32 %v2014, %v2023
        %v2059 = vadd.f32 %v2015, %v2027
        %v2060 = vadd.f32 %v2016, %v2023
        %v2061 = vadd.f32 %v2017, %v2027
        %v2062 = vmul.f32 %v2030, 0.01
        %v2063 = vmul.f32 %v2031, 0.01
        %v2064 = vmul.f32 %v2032, 0.01
        %v2065 = vmul.f32 %v2033, 0.01
        %v2066 = vmul.f32 %v2034, 0.01
        %v2067 = vmul.f32 %v2035, 0.01
        %v2068 = vmul.f32 %v2036, 0.01
        %v2069 = vmul.f32 %v2037, 0.01
        %v2070 = vmul.f32 %v2038, 0.01
        %v2071 = vmul.f32 %v2039, 0.01
        %v2072 = vmul.f32 %v2040, 0.01
        %v2073 = vmul.f32 %v2041, 0.01
        %v2074 = vmul.f32 %v2042, 0.01
        %v2075 = vmul.f32 %v2043, 0.01
        %v2076 = vmul.f32 %v2044, 0.01
        %v2077 = vmul.f32 %v2045, 0.01
        %v2078 = vmul.f32 %v2046, 0.01
        %v2079 = vmul.f32 %v2047, 0.01
        %v2080 = vmul.f32 %v2048, 0.01
        %v2081 = vmul.f32 %v2049, 0.01
        %v2082 = vmul.f32 %v2050, 0.01
        %v2083 = vmul.f32 %v2051, 0.01
        %v2084 = vmul.f32 %v2052, 0.01
        %v2085 = vmul.f32 %v2053, 0.01
        %v2086 = vmul.f32 %v2054, 0.01
        %v2087 = vmul.f32 %v2055, 0.01
        %v2088 = vmul.f32 %v2056, 0.01
        %v2089 = vmul.f32 %v2057, 0.01
        %v2090 = vmul.f32 %v2058, 0.01
        %v2091 = vmul.f32 %v2059, 0.01
        %v2092 = vmul.f32 %v2060, 0.01
        %v2093 = vmul.f32 %v2061, 0.01
        %v2094 = vmax.f32 %v2030, %v2062
        %v2095 = vmax.f32 %v2031, %v2063
        %v2096 = vmax.f32 %v2032, %v2064
        %v2097 = vmax.f32 %v2033, %v2065
        %v2098 = vmax.f32 %v2034, %v2066
        %v2099 = vmax.f32 %v2035, %v2067
        %v2100 = vmax.f32 %v2036, %v2068
        %v2101 = vmax.f32 %v2037, %v2069
        %v2102 = vmax.f32 %v2038, %v2070
        %v2103 = vmax.f32 %v2039, %v2071
        %v2104 = vmax.f32 %v2040, %v2072
        %v2105 = vmax.f32 %v2041, %v2073
        %v2106 = vmax.f32 %v2042, %v2074
        %v2107 = vmax.f32 %v2043, %v2075
        %v2108 = vmax.f32 %v2044, %v2076
        %v2109 = vmax.f32 %v2045, %v2077
        %v2110 = vmax.f32 %v2046, %v2078
        %v2111 = vmax.f32 %v2047, %v2079
        %v2112 = vmax.f32 %v2048, %v2080
        %v2113 = vmax.f32 %v2049, %v2081
        %v2114 = vmax.f32 %v2050, %v2082
        %v2115 = vmax.f32 %v2051, %v2083
        %v2116 = vmax.f32 %v2052, %v2084
        %v2117 = vmax.f32 %v2053, %v2085
        %v2118 = vmax.f32 %v2054, %v2086
        %v2119 = vmax.f32 %v2055, %v2087
        %v2120 = vmax.f32 %v2056, %v2088
        %v2121 = vmax.f32 %v2057, %v2089
        %v2122 = vmax.f32 %v2058, %v2090
        %v2123 = vmax.f32 %v2059, %v2091
        %v2124 = vmax.f32 %v2060, %v2092
        %v2125 = vmax.f32 %v2061, %v2093
        %v2126 = vpack.c.bf16 %v2096, %v2094
        %v2127 = vpack.c.bf16 %v2097, %v2095
        %v2128 = vpack.c.bf16 %v2100, %v2098
        %v2129 = vpack.c.bf16 %v2101, %v2099
        %v2130 = vpack.c.bf16 %v2104, %v2102
        %v2131 = vpack.c.bf16 %v2105, %v2103
        %v2132 = vpack.c.bf16 %v2108, %v2106
        %v2133 = vpack.c.bf16 %v2109, %v2107
        %v2134 = vpack.c.bf16 %v2112, %v2110
        %v2135 = vpack.c.bf16 %v2113, %v2111
        %v2136 = vpack.c.bf16 %v2116, %v2114
        %v2137 = vpack.c.bf16 %v2117, %v2115
        %v2138 = vpack.c.bf16 %v2120, %v2118
        %v2139 = vpack.c.bf16 %v2121, %v2119
        %v2140 = vpack.c.bf16 %v2124, %v2122
        %v2141 = vpack.c.bf16 %v2125, %v2123
        %v2142 = vld [vmem:[#allocation13] sm:$0xf]
        %v2143 = vld [vmem:[#allocation13 + $0x4] sm:$0xf]
        %v2144 = vld [vmem:[#allocation13 + $0x8] sm:$0xf]
        %v2145 = vld [vmem:[#allocation13 + $0xc] sm:$0xf]
        %v2146 = vld [vmem:[#allocation13 + $0x10] sm:$0xf]
        %v2147 = vld [vmem:[#allocation13 + $0x14] sm:$0xf]
        %v2148 = vld [vmem:[#allocation13 + $0x18] sm:$0xf]
        %v2149 = vld [vmem:[#allocation13 + $0x1c] sm:$0xf]
        %v2150 = vld [vmem:[#allocation13 + $0x20] sm:$0xf]
        %v2151 = vld [vmem:[#allocation13 + $0x24] sm:$0xf]
        %v2152 = vld [vmem:[#allocation13 + $0x28] sm:$0xf]
        %v2153 = vld [vmem:[#allocation13 + $0x2c] sm:$0xf]
        %v2154 = vld [vmem:[#allocation13 + $0x30] sm:$0xf]
        %v2155 = vld [vmem:[#allocation13 + $0x34] sm:$0xf]
        %v2156 = vld [vmem:[#allocation13 + $0x38] sm:$0xf]
        %v2157 = vld [vmem:[#allocation13 + $0x3c] sm:$0xf]
        %v2158 = vld [vmem:[#allocation13 + $0x40] sm:$0xf]
        %v2159 = vld [vmem:[#allocation13 + $0x44] sm:$0xf]
        %v2160 = vld [vmem:[#allocation13 + $0x48] sm:$0xf]
        %v2161 = vld [vmem:[#allocation13 + $0x4c] sm:$0xf]
        %v2162 = vld [vmem:[#allocation13 + $0x50] sm:$0xf]
        %v2163 = vld [vmem:[#allocation13 + $0x54] sm:$0xf]
        %v2164 = vld [vmem:[#allocation13 + $0x58] sm:$0xf]
        %v2165 = vld [vmem:[#allocation13 + $0x5c] sm:$0xf]
        %v2166 = vld [vmem:[#allocation13 + $0x60] sm:$0xf]
        %v2167 = vld [vmem:[#allocation13 + $0x64] sm:$0xf]
        %v2168 = vld [vmem:[#allocation13 + $0x68] sm:$0xf]
        %v2169 = vld [vmem:[#allocation13 + $0x6c] sm:$0xf]
        %v2170 = vld [vmem:[#allocation13 + $0x70] sm:$0xf]
        %v2171 = vld [vmem:[#allocation13 + $0x74] sm:$0xf]
        %v2172 = vld [vmem:[#allocation13 + $0x78] sm:$0xf]
        %v2173 = vld [vmem:[#allocation13 + $0x7c] sm:$0xf]
        %v2174 = vld [vmem:[%s12] sm:$0x1]
        %v2176 = vlaneseq
        %v2177 = vshrl.u32 %v2176, 7
        %v2178 = vsub.s32 0, %v2177
        %v2179 = vrot.slane %v2174, %v2178
        %v2213 = vunpack.c.l.b16 %v2142
        %v2214 = vunpack.c.l.b16 %v2143
        %v2215 = vunpack.c.l.b16 %v2144
        %v2216 = vunpack.c.l.b16 %v2145
        %v2217 = vunpack.c.l.b16 %v2146
        %v2218 = vunpack.c.l.b16 %v2147
        %v2219 = vunpack.c.l.b16 %v2148
        %v2220 = vunpack.c.l.b16 %v2149
        %v2221 = vunpack.c.l.b16 %v2150
        %v2222 = vunpack.c.l.b16 %v2151
        %v2223 = vunpack.c.l.b16 %v2152
        %v2224 = vunpack.c.l.b16 %v2153
        %v2225 = vunpack.c.l.b16 %v2154
        %v2226 = vunpack.c.l.b16 %v2155
        %v2227 = vunpack.c.l.b16 %v2156
        %v2228 = vunpack.c.l.b16 %v2157
        %v2229 = vunpack.c.l.b16 %v2158
        %v2230 = vunpack.c.l.b16 %v2159
        %v2231 = vunpack.c.l.b16 %v2160
        %v2232 = vunpack.c.l.b16 %v2161
        %v2233 = vunpack.c.l.b16 %v2162
        %v2234 = vunpack.c.l.b16 %v2163
        %v2235 = vunpack.c.l.b16 %v2164
        %v2236 = vunpack.c.l.b16 %v2165
        %v2237 = vunpack.c.l.b16 %v2166
        %v2238 = vunpack.c.l.b16 %v2167
        %v2239 = vunpack.c.l.b16 %v2168
        %v2240 = vunpack.c.l.b16 %v2169
        %v2241 = vunpack.c.l.b16 %v2170
        %v2242 = vunpack.c.l.b16 %v2171
        %v2243 = vunpack.c.l.b16 %v2172
        %v2244 = vunpack.c.l.b16 %v2173
        %v2245 = vpack.c.b16 %v2214, %v2213
        %v2246 = vpack.c.b16 %v2216, %v2215
        %v2247 = vpack.c.b16 %v2218, %v2217
        %v2248 = vpack.c.b16 %v2220, %v2219
        %v2249 = vpack.c.b16 %v2222, %v2221
        %v2250 = vpack.c.b16 %v2224, %v2223
        %v2251 = vpack.c.b16 %v2226, %v2225
        %v2252 = vpack.c.b16 %v2228, %v2227
        %v2253 = vpack.c.b16 %v2230, %v2229
        %v2254 = vpack.c.b16 %v2232, %v2231
        %v2255 = vpack.c.b16 %v2234, %v2233
        %v2256 = vpack.c.b16 %v2236, %v2235
        %v2257 = vpack.c.b16 %v2238, %v2237
        %v2258 = vpack.c.b16 %v2240, %v2239
        %v2259 = vpack.c.b16 %v2242, %v2241
        %v2260 = vpack.c.b16 %v2244, %v2243
        %2277 = vmatprep.subr.bf16.mxu0 0
        %2278 = vmatpush1.bf16.msra.mxu0 %v2252
        %2279 = vmatprep.subr.bf16.mxu0 0
        %2280 = vmatpush1.bf16.msra.mxu0 %v2251
        %2281 = vmatprep.subr.bf16.mxu0 0
        %2282 = vmatpush1.bf16.msra.mxu0 %v2250
        %2283 = vmatprep.subr.bf16.mxu0 0
        %2284 = vmatpush1.bf16.msra.mxu0 %v2249
        %2285 = vmatprep.subr.bf16.mxu0 0
        %2286 = vmatpush1.bf16.msra.mxu0 %v2248
        %2287 = vmatprep.subr.bf16.mxu0 0
        %2288 = vmatpush1.bf16.msra.mxu0 %v2247
        %2289 = vmatprep.subr.bf16.mxu0 0
        %2290 = vmatpush1.bf16.msra.mxu0 %v2246
        %2291 = vmatprep.subr.bf16.mxu0 0
        %2292 = vmatpush1.bf16.msra.mxu0 %v2245
        %2293 = vmatprep.subr.bf16.mxu0 0
        %2294 = vmatpush2.bf16.msra.mxu0 %v2260
        %2295 = vmatprep.subr.bf16.mxu0 0
        %2296 = vmatpush2.bf16.msra.mxu0 %v2259
        %2297 = vmatprep.subr.bf16.mxu0 0
        %2298 = vmatpush2.bf16.msra.mxu0 %v2258
        %2299 = vmatprep.subr.bf16.mxu0 0
        %2300 = vmatpush2.bf16.msra.mxu0 %v2257
        %2301 = vmatprep.subr.bf16.mxu0 0
        %2302 = vmatpush2.bf16.msra.mxu0 %v2256
        %2303 = vmatprep.subr.bf16.mxu0 0
        %2304 = vmatpush2.bf16.msra.mxu0 %v2255
        %2305 = vmatprep.subr.bf16.mxu0 0
        %2306 = vmatpush2.bf16.msra.mxu0 %v2254
        %2307 = vmatprep.subr.bf16.mxu0 0
        %2308 = vmatpush2.bf16.msra.mxu0 %v2253
        %2309 = vmatprep.mubr.bf16.mxu0 %v2127
        %2310 = vmatmul.mubr.bf16.gmra.mxu0 %v2126
        %v2311 = vpop.f32.mrf.mxu0
        %v2312 = vadd.f32 %v2179, %v2311
        %v2313 = vpop.f32.mrf.mxu0
        %v2314 = vpop.f32.mrf.mxu0
        %v2315 = vadd.f32 %v2179, %v2314
        %v2316 = vpop.f32.mrf.mxu0
        %2317 = vmatprep.mubr.bf16.mxu0 %v2129
        %2318 = vmatmul.mubr.bf16.gmra.mxu0 %v2128
        %v2319 = vpop.f32.mrf.mxu0
        %v2320 = vadd.f32 %v2179, %v2319
        %v2321 = vpop.f32.mrf.mxu0
        %v2322 = vpop.f32.mrf.mxu0
        %v2323 = vadd.f32 %v2179, %v2322
        %v2324 = vpop.f32.mrf.mxu0
        %2325 = vmatprep.mubr.bf16.mxu0 %v2131
        %2326 = vmatmul.mubr.bf16.gmra.mxu0 %v2130
        %v2327 = vpop.f32.mrf.mxu0
        %v2328 = vadd.f32 %v2179, %v2327
        %v2329 = vpop.f32.mrf.mxu0
        %v2330 = vpop.f32.mrf.mxu0
        %v2331 = vadd.f32 %v2179, %v2330
        %v2332 = vpop.f32.mrf.mxu0
        %2333 = vmatprep.mubr.bf16.mxu0 %v2133
        %2334 = vmatmul.mubr.bf16.gmra.mxu0 %v2132
        %v2335 = vpop.f32.mrf.mxu0
        %v2336 = vadd.f32 %v2179, %v2335
        %v2337 = vpop.f32.mrf.mxu0
        %v2338 = vpop.f32.mrf.mxu0
        %v2339 = vadd.f32 %v2179, %v2338
        %v2340 = vpop.f32.mrf.mxu0
        %2341 = vmatprep.mubr.bf16.mxu0 %v2135
        %2342 = vmatmul.mubr.bf16.gmra.mxu0 %v2134
        %v2343 = vpop.f32.mrf.mxu0
        %v2344 = vadd.f32 %v2179, %v2343
        %v2345 = vpop.f32.mrf.mxu0
        %v2346 = vpop.f32.mrf.mxu0
        %v2347 = vadd.f32 %v2179, %v2346
        %v2348 = vpop.f32.mrf.mxu0
        %2349 = vmatprep.mubr.bf16.mxu0 %v2137
        %2350 = vmatmul.mubr.bf16.gmra.mxu0 %v2136
        %v2351 = vpop.f32.mrf.mxu0
        %v2352 = vadd.f32 %v2179, %v2351
        %v2353 = vpop.f32.mrf.mxu0
        %v2354 = vpop.f32.mrf.mxu0
        %v2355 = vadd.f32 %v2179, %v2354
        %v2356 = vpop.f32.mrf.mxu0
        %2357 = vmatprep.mubr.bf16.mxu0 %v2139
        %2358 = vmatmul.mubr.bf16.gmra.mxu0 %v2138
        %v2359 = vpop.f32.mrf.mxu0
        %v2360 = vadd.f32 %v2179, %v2359
        %v2361 = vpop.f32.mrf.mxu0
        %v2362 = vpop.f32.mrf.mxu0
        %v2363 = vadd.f32 %v2179, %v2362
        %v2364 = vpop.f32.mrf.mxu0
        %2365 = vmatprep.mubr.bf16.mxu0 %v2141
        %2366 = vmatmul.mubr.bf16.gmra.mxu0 %v2140
        %v2367 = vpop.f32.mrf.mxu0
        %v2368 = vadd.f32 %v2179, %v2367
        %v2369 = vpop.f32.mrf.mxu0
        %v2370 = vpop.f32.mrf.mxu0
        %v2371 = vadd.f32 %v2179, %v2370
        %v2372 = vpop.f32.mrf.mxu0
        %2373 = vdwg.mxu0
        %v2374 = vmul.f32 %v2312, 0.01
        %v2375 = vmul.f32 %v2315, 0.01
        %v2376 = vmul.f32 %v2320, 0.01
        %v2377 = vmul.f32 %v2323, 0.01
        %v2378 = vmul.f32 %v2328, 0.01
        %v2379 = vmul.f32 %v2331, 0.01
        %v2380 = vmul.f32 %v2336, 0.01
        %v2381 = vmul.f32 %v2339, 0.01
        %v2382 = vmul.f32 %v2344, 0.01
        %v2383 = vmul.f32 %v2347, 0.01
        %v2384 = vmul.f32 %v2352, 0.01
        %v2385 = vmul.f32 %v2355, 0.01
        %v2386 = vmul.f32 %v2360, 0.01
        %v2387 = vmul.f32 %v2363, 0.01
        %v2388 = vmul.f32 %v2368, 0.01
        %v2389 = vmul.f32 %v2371, 0.01
        %v2390 = vmax.f32 %v2312, %v2374
        %v2391 = vmax.f32 %v2315, %v2375
        %v2392 = vmax.f32 %v2320, %v2376
        %v2393 = vmax.f32 %v2323, %v2377
        %v2394 = vmax.f32 %v2328, %v2378
        %v2395 = vmax.f32 %v2331, %v2379
        %v2396 = vmax.f32 %v2336, %v2380
        %v2397 = vmax.f32 %v2339, %v2381
        %v2398 = vmax.f32 %v2344, %v2382
        %v2399 = vmax.f32 %v2347, %v2383
        %v2400 = vmax.f32 %v2352, %v2384
        %v2401 = vmax.f32 %v2355, %v2385
        %v2402 = vmax.f32 %v2360, %v2386
        %v2403 = vmax.f32 %v2363, %v2387
        %v2404 = vmax.f32 %v2368, %v2388
        %v2405 = vmax.f32 %v2371, %v2389
        %v2406 = vld [vmem:[%s13] sm:$0x1]
        %v2408 = vlaneseq
        %v2409 = vshrl.u32 %v2408, 7
        %v2410 = vsub.s32 0, %v2409
        %v2411 = vrot.slane %v2406, %v2410
        %v2413 = vmul.f32 %v2390, %v2411
        %v2414 = vmul.f32 %v2391, %v2411
        %v2415 = vmul.f32 %v2392, %v2411
        %v2416 = vmul.f32 %v2393, %v2411
        %v2417 = vmul.f32 %v2394, %v2411
        %v2418 = vmul.f32 %v2395, %v2411
        %v2419 = vmul.f32 %v2396, %v2411
        %v2420 = vmul.f32 %v2397, %v2411
        %v2421 = vmul.f32 %v2398, %v2411
        %v2422 = vmul.f32 %v2399, %v2411
        %v2423 = vmul.f32 %v2400, %v2411
        %v2424 = vmul.f32 %v2401, %v2411
        %v2425 = vmul.f32 %v2402, %v2411
        %v2426 = vmul.f32 %v2403, %v2411
        %v2427 = vmul.f32 %v2404, %v2411
        %v2428 = vmul.f32 %v2405, %v2411
        %2429 = vadd.xlane.f32.xlu0 %v2413
        %v2430 = vpop.xlane.xlu0 %2429
        %2431 = vadd.xlane.f32.xlu0 %v2414
        %v2432 = vpop.xlane.xlu0 %2431
        %2433 = vadd.xlane.f32.xlu0 %v2415
        %v2434 = vpop.xlane.xlu0 %2433
        %2435 = vadd.xlane.f32.xlu0 %v2416
        %v2436 = vpop.xlane.xlu0 %2435
        %2437 = vadd.xlane.f32.xlu0 %v2417
        %v2438 = vpop.xlane.xlu0 %2437
        %2439 = vadd.xlane.f32.xlu0 %v2418
        %v2440 = vpop.xlane.xlu0 %2439
        %2441 = vadd.xlane.f32.xlu0 %v2419
        %v2442 = vpop.xlane.xlu0 %2441
        %2443 = vadd.xlane.f32.xlu0 %v2420
        %v2444 = vpop.xlane.xlu0 %2443
        %2445 = vadd.xlane.f32.xlu0 %v2421
        %v2446 = vpop.xlane.xlu0 %2445
        %2447 = vadd.xlane.f32.xlu0 %v2422
        %v2448 = vpop.xlane.xlu0 %2447
        %2449 = vadd.xlane.f32.xlu0 %v2423
        %v2450 = vpop.xlane.xlu0 %2449
        %2451 = vadd.xlane.f32.xlu0 %v2424
        %v2452 = vpop.xlane.xlu0 %2451
        %2453 = vadd.xlane.f32.xlu0 %v2425
        %v2454 = vpop.xlane.xlu0 %2453
        %2455 = vadd.xlane.f32.xlu0 %v2426
        %v2456 = vpop.xlane.xlu0 %2455
        %2457 = vadd.xlane.f32.xlu0 %v2427
        %v2458 = vpop.xlane.xlu0 %2457
        %2459 = vadd.xlane.f32.xlu0 %v2428
        %v2460 = vpop.xlane.xlu0 %2459
        %v2461 = vld [vmem:[#allocation2] sm:$0x1]
        %v2463 = vlaneseq
        %v2464 = vshrl.u32 %v2463, 7
        %v2465 = vsub.s32 0, %v2464
        %v2466 = vrot.slane %v2461, %v2465
        %v2468 = vadd.f32 %v2430, %v2466
        %v2469 = vadd.f32 %v2432, %v2466
        %v2470 = vadd.f32 %v2434, %v2466
        %v2471 = vadd.f32 %v2436, %v2466
        %v2472 = vadd.f32 %v2438, %v2466
        %v2473 = vadd.f32 %v2440, %v2466
        %v2474 = vadd.f32 %v2442, %v2466
        %v2475 = vadd.f32 %v2444, %v2466
        %v2476 = vadd.f32 %v2446, %v2466
        %v2477 = vadd.f32 %v2448, %v2466
        %v2478 = vadd.f32 %v2450, %v2466
        %v2479 = vadd.f32 %v2452, %v2466
        %v2480 = vadd.f32 %v2454, %v2466
        %v2481 = vadd.f32 %v2456, %v2466
        %v2482 = vadd.f32 %v2458, %v2466
        %v2483 = vadd.f32 %v2460, %v2466
        %vm2484 = vcmask 7168
        %2485 = vst.msk [vmem:[%s604] sm:$0xff] %vm2484, %v2468
        %2486 = vst.msk [vmem:[%s604 + $0x8] sm:$0xff] %vm2484, %v2469
        %2487 = vst.msk [vmem:[%s604 + $0x10] sm:$0xff] %vm2484, %v2470
        %2488 = vst.msk [vmem:[%s604 + $0x18] sm:$0xff] %vm2484, %v2471
        %2489 = vst.msk [vmem:[%s604 + $0x20] sm:$0xff] %vm2484, %v2472
        %2490 = vst.msk [vmem:[%s604 + $0x28] sm:$0xff] %vm2484, %v2473
        %2491 = vst.msk [vmem:[%s604 + $0x30] sm:$0xff] %vm2484, %v2474
        %2492 = vst.msk [vmem:[%s604 + $0x38] sm:$0xff] %vm2484, %v2475
        %2493 = vst.msk [vmem:[%s604 + $0x40] sm:$0xff] %vm2484, %v2476
        %2494 = vst.msk [vmem:[%s604 + $0x48] sm:$0xff] %vm2484, %v2477
        %2495 = vst.msk [vmem:[%s604 + $0x50] sm:$0xff] %vm2484, %v2478
        %2496 = vst.msk [vmem:[%s604 + $0x58] sm:$0xff] %vm2484, %v2479
        %2497 = vst.msk [vmem:[%s604 + $0x60] sm:$0xff] %vm2484, %v2480
        %2498 = vst.msk [vmem:[%s604 + $0x68] sm:$0xff] %vm2484, %v2481
        %2499 = vst.msk [vmem:[%s604 + $0x70] sm:$0xff] %vm2484, %v2482
        %2500 = vst.msk [vmem:[%s604 + $0x78] sm:$0xff] %vm2484, %v2483
        %s2501 = smul.u32 16, %s34
        %p2502 = scmp.lt.s32.totalorder %s2501, 31
        %s2503 = scalar_select %p2502, %s2501, 31
        %s2504 = smul.addr %s2503, 8
        %s2505 = scalar_lea.vmem %s15, %s2504
        // Predicated region
        $region109: #{tpu_custom_call.1} parent=79 // pred_check
          %p2506 = pneg %p372
        $region110: #{tpu_custom_call.1} parent=79 // pred_check_branch
          %2508 = sbr.rel (%p2506) target = $region112
        $region111: #{tpu_custom_call.1} parent=79 // pred_region
          %s2509 = smul.u32 16, %s34
        $region112: #{tpu_custom_call.1} parent=79 // pred_fallthru
          _
      $region80: #{tpu_custom_call.1} parent=5 // pred_fallthru
        _
      %p2510 = scmp.le.s32.totalorder 2, %s29
      // Predicated region
      $region113: #{tpu_custom_call.1} parent=5 // pred_check
        %p2511 = pneg %p2510
      $region114: #{tpu_custom_call.1} parent=5 // pred_check_branch
        %2513 = sbr.rel (%p2511) target = $region116
      $region115: #{tpu_custom_call.1} parent=5 // pred_region
        %s2514 = ssub.s32 %s29, 2
        // Predicated region
        $region117: #{tpu_custom_call.1} parent=115 // pred_check
          %p2515 = pneg %p378
        $region118: #{tpu_custom_call.1} parent=115 // pred_check_branch
          %2517 = sbr.rel (%p2515) target = $region120
        $region119: #{tpu_custom_call.1} parent=115 // pred_region
          %s2518 = smul.u32 16, %s35
          %p2519 = scmp.lt.s32.totalorder %s2518, 31
          %s2520 = scalar_select %p2519, %s2518, 31
          %s2521 = smul.addr %s2520, 8
          %s2522 = scalar_lea.vmem %s15, %s2521
        $region120: #{tpu_custom_call.1} parent=115 // pred_fallthru
          _
      $region116: #{tpu_custom_call.1} parent=5 // pred_fallthru
        _
    $region6: #{tpu_custom_call.1} parent=1 // loop_footer
      %s33 = sadd.s32 1, %s29
    $region7: #{tpu_custom_call.1} parent=1 // loop_footer_branch
      %28 = sbr.rel target = $region3
    $region8: #{tpu_custom_call.1} parent=1 // loop_exit
      _
    %2523 = vsyncpa [#allocation4], 1
    %s2524 = scalar_lea.sflag [#allocation4], 1
    %2525 = vsyncpa %s2524, 1
    %2526 = vsyncpa [#allocation6], 1
    %2527 = vsyncpa [#allocation9], 1
    %2528 = vsyncpa [#allocation12], 1

</llo_original>
